<compile_context>
chip_gen: v7x
topology: tpu7x:2x2x1
jax: 0.10.0
libtpu: 0.0.40
codegen_flags: <defaults>
</compile_context>

<pallas_src>
import functools

import jax
import jax.numpy as jnp
import numpy as np
from jax.experimental import pallas as pl
from jax.experimental.pallas import tpu as pltpu


def _gauss5x5_kernel(x_ref, out_ref, rowpad_ref, colpad_ref):
    """Reflect-pad(2) + depthwise 5x5 binomial Gaussian on (B, H, W) planes.

    The 5x5/256 kernel is the outer product of [1,4,6,4,1] with itself (/256),
    so it is applied as a vertical pass followed by a horizontal pass with one
    final 1/256 scale.  Reflect padding is materialized in VMEM scratch
    (rowpad/colpad) with a handful of static-slice copies — no HBM padding
    traffic.  Reflect-pad commutes with the orthogonal 1-D pass, so padding
    the columns *after* the vertical pass is exact.
    """
    B, H, W = out_ref.shape
    x = x_ref[...].astype(jnp.float32)                      # (B, H, W)

    # ---- reflect pad along rows (sublane dim) into scratch (B, H+4, W) ----
    rowpad_ref[:, 2:H + 2, :] = x
    rowpad_ref[:, 0:1, :] = x[:, 2:3, :]                    # row -2 -> row 2
    rowpad_ref[:, 1:2, :] = x[:, 1:2, :]                    # row -1 -> row 1
    rowpad_ref[:, H + 2:H + 3, :] = x[:, H - 2:H - 1, :]    # row H   -> row H-2
    rowpad_ref[:, H + 3:H + 4, :] = x[:, H - 3:H - 2, :]    # row H+1 -> row H-3

    # ---- vertical pass: taps [1,4,6,4,1], 5 sublane-shifted FMAs (VPU) ----
    v = (rowpad_ref[:, 0:H, :] + rowpad_ref[:, 4:H + 4, :]
         + 4.0 * (rowpad_ref[:, 1:H + 1, :] + rowpad_ref[:, 3:H + 3, :])
         + 6.0 * rowpad_ref[:, 2:H + 2, :])

    # ---- reflect pad along cols (lane dim) into scratch (B, H, W+4) ----
    colpad_ref[:, :, 2:W + 2] = v
    colpad_ref[:, :, 0:1] = v[:, :, 2:3]                    # col -2 -> col 2
    colpad_ref[:, :, 1:2] = v[:, :, 1:2]                    # col -1 -> col 1
    colpad_ref[:, :, W + 2:W + 3] = v[:, :, W - 2:W - 1]    # col W   -> col W-2
    colpad_ref[:, :, W + 3:W + 4] = v[:, :, W - 3:W - 2]    # col W+1 -> col W-3

    # ---- horizontal pass + single 1/256 normalization ----
    out = (colpad_ref[:, :, 0:W] + colpad_ref[:, :, 4:W + 4]
           + 4.0 * (colpad_ref[:, :, 1:W + 1] + colpad_ref[:, :, 3:W + 3])
           + 6.0 * colpad_ref[:, :, 2:W + 2]) * jnp.float32(1.0 / 256.0)

    out_ref[...] = out.astype(out_ref.dtype)


def _planes_per_block(num_planes, h, w, itemsize, budget_bytes=2 * 1024 * 1024):
    """Largest divisor of num_planes whose (b, h, w) input block fits the budget.

    Total VMEM use is ~6.3x the input block (double-buffered in/out blocks +
    two f32 padded scratches), so a 2 MiB input-block budget stays under the
    scoped-VMEM default on v5e/v6e/v7x without needing vmem_limit_bytes.
    """
    per_plane = h * w * itemsize
    b = max(1, min(num_planes, budget_bytes // max(per_plane, 1)))
    while num_planes % b:
        b -= 1
    return b


def conv_gauss(planes):
    """One pyramid-level filter on a stack of (P, H, W) planes."""
    P, H, W = planes.shape
    assert H >= 3 and W >= 3, "reflect padding of 2 needs spatial dims >= 3"
    B = _planes_per_block(P, H, W, planes.dtype.itemsize)
    grid = (P // B,)
    return pl.pallas_call(
        _gauss5x5_kernel,
        out_shape=jax.ShapeDtypeStruct((P, H, W), planes.dtype),
        grid=grid,
        in_specs=[pl.BlockSpec((B, H, W), lambda p: (p, 0, 0))],
        out_specs=pl.BlockSpec((B, H, W), lambda p: (p, 0, 0)),
        scratch_shapes=[pltpu.VMEM((B, H + 4, W), jnp.float32),
                        pltpu.VMEM((B, H, W + 4), jnp.float32)],
        compiler_params=pltpu.CompilerParams(
            dimension_semantics=("parallel",)),   # v7x: shard plane chunks on 2 TCs
    )(planes)


@functools.partial(jax.jit, static_argnames=("num_high",))
def gauss_pyramid_conv(img, num_high=3):
    """Forward pass of Gauss_Pyramid_Conv: list of num_high+1 NCHW arrays."""
    N, C, H, W = img.shape
    current = img.reshape(N * C, H, W)            # fold (N, C) into one plane axis
    pyr = []
    for _ in range(num_high):
        filtered = conv_gauss(current)
        pyr.append(filtered)
        # TODO(synk): fuse this ::2 downsample as a second kernel output
        # (sublane/lane stride-2 compaction) to save one filtered-plane HBM
        # re-read per level; kept as an XLA strided slice for robust lowering
        # across v5e/v6e/v7x.
        current = filtered[:, ::2, ::2]
    pyr.append(current)
    return [a.reshape(N, C, a.shape[1], a.shape[2]) for a in pyr]


# ----------------------------- reference ------------------------------------

_GK2D = (np.outer([1.0, 4.0, 6.0, 4.0, 1.0],
                  [1.0, 4.0, 6.0, 4.0, 1.0]) / 256.0).astype(np.float32)


def _reference_pyramid(img, num_high=3):
    """Pure-JAX reference (lax depthwise conv), mirrors the PyTorch module."""
    C = img.shape[1]
    k = jnp.broadcast_to(jnp.asarray(_GK2D), (C, 1, 5, 5))
    current = img
    pyr = []
    for _ in range(num_high):
        xp = jnp.pad(current, ((0, 0), (0, 0), (2, 2), (2, 2)), mode="reflect")
        filtered = jax.lax.conv_general_dilated(
            xp, k, window_strides=(1, 1), padding="VALID",
            dimension_numbers=("NCHW", "OIHW", "NCHW"),
            feature_group_count=C)
        pyr.append(filtered)
        current = filtered[:, :, ::2, ::2]
    pyr.append(current)
    return pyr


if __name__ == "__main__":
    key = jax.random.PRNGKey(0)
    # channels=3 is what gauss_kernel(channels=3) + groups=C depthwise implies
    x = jax.random.normal(key, (2, 3, 16, 16), dtype=jnp.float32)

    pyr = gauss_pyramid_conv(x, num_high=3)
    pyr = [jax.block_until_ready(p) for p in pyr]

    ref = _reference_pyramid(x, num_high=3)
    assert len(pyr) == 4
    expected_shapes = [(2, 3, 16, 16), (2, 3, 8, 8), (2, 3, 4, 4), (2, 3, 2, 2)]
    for p, r, s in zip(pyr, ref, expected_shapes):
        assert p.shape == s, (p.shape, s)
        err = float(jnp.max(jnp.abs(p - r)))
        assert jnp.allclose(p, r, atol=1e-5, rtol=1e-5), err

    print("KERNEL_OK")
</pallas_src>

<mosaic_0001>
module attributes {stable_mosaic.version = 11 : i64} {
  func.func @_gauss5x5_kernel(%arg0: i32, %arg1: memref<6x8x8xf32, #tpu.memory_space<vmem>>, %arg2: memref<6x8x8xf32, #tpu.memory_space<vmem>>, %arg3: memref<6x12x8xf32, #tpu.memory_space<vmem>>, %arg4: memref<6x8x12xf32, #tpu.memory_space<vmem>>) attributes {dimension_semantics = [#tpu.dimension_semantics<parallel>], iteration_bounds = array<i64: 1>, scalar_prefetch = 0 : i64, scratch_operands = 2 : i64, tpu.core_type = #tpu.core_type<tc>, window_params = [{transform_indices = @transform_0, window_bounds = array<i64: 6, 8, 8>}, {transform_indices = @transform_1, window_bounds = array<i64: 6, 8, 8>}]} {
    %c0 = arith.constant 0 : index
    %c0_0 = arith.constant 0 : index
    %c0_1 = arith.constant 0 : index
    %0 = vector.load %arg1[%c0, %c0_0, %c0_1] : memref<6x8x8xf32, #tpu.memory_space<vmem>>, vector<6x8x8xf32>
    %c0_2 = arith.constant 0 : index
    %c2 = arith.constant 2 : index
    %c0_3 = arith.constant 0 : index
    %1 = vector.load %arg3[%c0_2, %c2, %c0_3] : memref<6x12x8xf32, #tpu.memory_space<vmem>>, vector<6x8x8xf32>
    tpu.vector_store %arg3[%c0_2, %c2, %c0_3], %0 {strides = array<i32>} : memref<6x12x8xf32, #tpu.memory_space<vmem>>, vector<6x8x8xf32>,
    %2 = vector.extract_strided_slice %0 {offsets = [0, 2, 0], sizes = [6, 1, 8], strides = [1, 1, 1]} : vector<6x8x8xf32> to vector<6x1x8xf32>
    %c0_4 = arith.constant 0 : index
    %c0_5 = arith.constant 0 : index
    %c0_6 = arith.constant 0 : index
    %3 = vector.load %arg3[%c0_4, %c0_5, %c0_6] : memref<6x12x8xf32, #tpu.memory_space<vmem>>, vector<6x1x8xf32>
    tpu.vector_store %arg3[%c0_4, %c0_5, %c0_6], %2 {strides = array<i32>} : memref<6x12x8xf32, #tpu.memory_space<vmem>>, vector<6x1x8xf32>,
    %4 = vector.extract_strided_slice %0 {offsets = [0, 1, 0], sizes = [6, 1, 8], strides = [1, 1, 1]} : vector<6x8x8xf32> to vector<6x1x8xf32>
    %c0_7 = arith.constant 0 : index
    %c1 = arith.constant 1 : index
    %c0_8 = arith.constant 0 : index
    %5 = vector.load %arg3[%c0_7, %c1, %c0_8] : memref<6x12x8xf32, #tpu.memory_space<vmem>>, vector<6x1x8xf32>
    tpu.vector_store %arg3[%c0_7, %c1, %c0_8], %4 {strides = array<i32>} : memref<6x12x8xf32, #tpu.memory_space<vmem>>, vector<6x1x8xf32>,
    %6 = vector.extract_strided_slice %0 {offsets = [0, 6, 0], sizes = [6, 1, 8], strides = [1, 1, 1]} : vector<6x8x8xf32> to vector<6x1x8xf32>
    %c0_9 = arith.constant 0 : index
    %c10 = arith.constant 10 : index
    %c0_10 = arith.constant 0 : index
    %7 = vector.load %arg3[%c0_9, %c10, %c0_10] : memref<6x12x8xf32, #tpu.memory_space<vmem>>, vector<6x1x8xf32>
    tpu.vector_store %arg3[%c0_9, %c10, %c0_10], %6 {strides = array<i32>} : memref<6x12x8xf32, #tpu.memory_space<vmem>>, vector<6x1x8xf32>,
    %8 = vector.extract_strided_slice %0 {offsets = [0, 5, 0], sizes = [6, 1, 8], strides = [1, 1, 1]} : vector<6x8x8xf32> to vector<6x1x8xf32>
    %c0_11 = arith.constant 0 : index
    %c11 = arith.constant 11 : index
    %c0_12 = arith.constant 0 : index
    %9 = vector.load %arg3[%c0_11, %c11, %c0_12] : memref<6x12x8xf32, #tpu.memory_space<vmem>>, vector<6x1x8xf32>
    tpu.vector_store %arg3[%c0_11, %c11, %c0_12], %8 {strides = array<i32>} : memref<6x12x8xf32, #tpu.memory_space<vmem>>, vector<6x1x8xf32>,
    %c0_13 = arith.constant 0 : index
    %c0_14 = arith.constant 0 : index
    %c0_15 = arith.constant 0 : index
    %10 = vector.load %arg3[%c0_13, %c0_14, %c0_15] : memref<6x12x8xf32, #tpu.memory_space<vmem>>, vector<6x8x8xf32>
    %c0_16 = arith.constant 0 : index
    %c4 = arith.constant 4 : index
    %c0_17 = arith.constant 0 : index
    %11 = vector.load %arg3[%c0_16, %c4, %c0_17] : memref<6x12x8xf32, #tpu.memory_space<vmem>>, vector<6x8x8xf32>
    %12 = arith.addf %10, %11 : vector<6x8x8xf32>
    %c0_18 = arith.constant 0 : index
    %c1_19 = arith.constant 1 : index
    %c0_20 = arith.constant 0 : index
    %13 = vector.load %arg3[%c0_18, %c1_19, %c0_20] : memref<6x12x8xf32, #tpu.memory_space<vmem>>, vector<6x8x8xf32>
    %c0_21 = arith.constant 0 : index
    %c3 = arith.constant 3 : index
    %c0_22 = arith.constant 0 : index
    %14 = vector.load %arg3[%c0_21, %c3, %c0_22] : memref<6x12x8xf32, #tpu.memory_space<vmem>>, vector<6x8x8xf32>
    %15 = arith.addf %13, %14 : vector<6x8x8xf32>
    %cst = arith.constant 4.000000e+00 : f32
    %16 = vector.broadcast %cst : f32 to vector<6x8x8xf32>
    %17 = arith.mulf %16, %15 : vector<6x8x8xf32>
    %18 = arith.addf %12, %17 : vector<6x8x8xf32>
    %c0_23 = arith.constant 0 : index
    %c2_24 = arith.constant 2 : index
    %c0_25 = arith.constant 0 : index
    %19 = vector.load %arg3[%c0_23, %c2_24, %c0_25] : memref<6x12x8xf32, #tpu.memory_space<vmem>>, vector<6x8x8xf32>
    %cst_26 = arith.constant 6.000000e+00 : f32
    %20 = vector.broadcast %cst_26 : f32 to vector<6x8x8xf32>
    %21 = arith.mulf %20, %19 : vector<6x8x8xf32>
    %22 = arith.addf %18, %21 : vector<6x8x8xf32>
    %c0_27 = arith.constant 0 : index
    %c0_28 = arith.constant 0 : index
    %c2_29 = arith.constant 2 : index
    %23 = vector.load %arg4[%c0_27, %c0_28, %c2_29] : memref<6x8x12xf32, #tpu.memory_space<vmem>>, vector<6x8x8xf32>
    tpu.vector_store %arg4[%c0_27, %c0_28, %c2_29], %22 {strides = array<i32>} : memref<6x8x12xf32, #tpu.memory_space<vmem>>, vector<6x8x8xf32>,
    %24 = vector.extract_strided_slice %22 {offsets = [0, 0, 2], sizes = [6, 8, 1], strides = [1, 1, 1]} : vector<6x8x8xf32> to vector<6x8x1xf32>
    %c0_30 = arith.constant 0 : index
    %c0_31 = arith.constant 0 : index
    %c0_32 = arith.constant 0 : index
    %25 = vector.load %arg4[%c0_30, %c0_31, %c0_32] : memref<6x8x12xf32, #tpu.memory_space<vmem>>, vector<6x8x1xf32>
    tpu.vector_store %arg4[%c0_30, %c0_31, %c0_32], %24 {strides = array<i32>} : memref<6x8x12xf32, #tpu.memory_space<vmem>>, vector<6x8x1xf32>,
    %26 = vector.extract_strided_slice %22 {offsets = [0, 0, 1], sizes = [6, 8, 1], strides = [1, 1, 1]} : vector<6x8x8xf32> to vector<6x8x1xf32>
    %c0_33 = arith.constant 0 : index
    %c0_34 = arith.constant 0 : index
    %c1_35 = arith.constant 1 : index
    %27 = vector.load %arg4[%c0_33, %c0_34, %c1_35] : memref<6x8x12xf32, #tpu.memory_space<vmem>>, vector<6x8x1xf32>
    tpu.vector_store %arg4[%c0_33, %c0_34, %c1_35], %26 {strides = array<i32>} : memref<6x8x12xf32, #tpu.memory_space<vmem>>, vector<6x8x1xf32>,
    %28 = vector.extract_strided_slice %22 {offsets = [0, 0, 6], sizes = [6, 8, 1], strides = [1, 1, 1]} : vector<6x8x8xf32> to vector<6x8x1xf32>
    %c0_36 = arith.constant 0 : index
    %c0_37 = arith.constant 0 : index
    %c10_38 = arith.constant 10 : index
    %29 = vector.load %arg4[%c0_36, %c0_37, %c10_38] : memref<6x8x12xf32, #tpu.memory_space<vmem>>, vector<6x8x1xf32>
    tpu.vector_store %arg4[%c0_36, %c0_37, %c10_38], %28 {strides = array<i32>} : memref<6x8x12xf32, #tpu.memory_space<vmem>>, vector<6x8x1xf32>,
    %30 = vector.extract_strided_slice %22 {offsets = [0, 0, 5], sizes = [6, 8, 1], strides = [1, 1, 1]} : vector<6x8x8xf32> to vector<6x8x1xf32>
    %c0_39 = arith.constant 0 : index
    %c0_40 = arith.constant 0 : index
    %c11_41 = arith.constant 11 : index
    %31 = vector.load %arg4[%c0_39, %c0_40, %c11_41] : memref<6x8x12xf32, #tpu.memory_space<vmem>>, vector<6x8x1xf32>
    tpu.vector_store %arg4[%c0_39, %c0_40, %c11_41], %30 {strides = array<i32>} : memref<6x8x12xf32, #tpu.memory_space<vmem>>, vector<6x8x1xf32>,
    %c0_42 = arith.constant 0 : index
    %c0_43 = arith.constant 0 : index
    %c0_44 = arith.constant 0 : index
    %32 = vector.load %arg4[%c0_42, %c0_43, %c0_44] : memref<6x8x12xf32, #tpu.memory_space<vmem>>, vector<6x8x8xf32>
    %c0_45 = arith.constant 0 : index
    %c0_46 = arith.constant 0 : index
    %c4_47 = arith.constant 4 : index
    %33 = vector.load %arg4[%c0_45, %c0_46, %c4_47] : memref<6x8x12xf32, #tpu.memory_space<vmem>>, vector<6x8x8xf32>
    %34 = arith.addf %32, %33 : vector<6x8x8xf32>
    %c0_48 = arith.constant 0 : index
    %c0_49 = arith.constant 0 : index
    %c1_50 = arith.constant 1 : index
    %35 = vector.load %arg4[%c0_48, %c0_49, %c1_50] : memref<6x8x12xf32, #tpu.memory_space<vmem>>, vector<6x8x8xf32>
    %c0_51 = arith.constant 0 : index
    %c0_52 = arith.constant 0 : index
    %c3_53 = arith.constant 3 : index
    %36 = vector.load %arg4[%c0_51, %c0_52, %c3_53] : memref<6x8x12xf32, #tpu.memory_space<vmem>>, vector<6x8x8xf32>
    %37 = arith.addf %35, %36 : vector<6x8x8xf32>
    %cst_54 = arith.constant 4.000000e+00 : f32
    %38 = vector.broadcast %cst_54 : f32 to vector<6x8x8xf32>
    %39 = arith.mulf %38, %37 : vector<6x8x8xf32>
    %40 = arith.addf %34, %39 : vector<6x8x8xf32>
    %c0_55 = arith.constant 0 : index
    %c0_56 = arith.constant 0 : index
    %c2_57 = arith.constant 2 : index
    %41 = vector.load %arg4[%c0_55, %c0_56, %c2_57] : memref<6x8x12xf32, #tpu.memory_space<vmem>>, vector<6x8x8xf32>
    %cst_58 = arith.constant 6.000000e+00 : f32
    %42 = vector.broadcast %cst_58 : f32 to vector<6x8x8xf32>
    %43 = arith.mulf %42, %41 : vector<6x8x8xf32>
    %44 = arith.addf %40, %43 : vector<6x8x8xf32>
    %cst_59 = arith.constant 3.906250e-03 : f32
    %45 = vector.broadcast %cst_59 : f32 to vector<6x8x8xf32>
    %46 = arith.mulf %44, %45 : vector<6x8x8xf32>
    %c0_60 = arith.constant 0 : index
    %c0_61 = arith.constant 0 : index
    %c0_62 = arith.constant 0 : index
    %47 = vector.load %arg2[%c0_60, %c0_61, %c0_62] : memref<6x8x8xf32, #tpu.memory_space<vmem>>, vector<6x8x8xf32>
    tpu.vector_store %arg2[%c0_60, %c0_61, %c0_62], %46 {strides = array<i32>} : memref<6x8x8xf32, #tpu.memory_space<vmem>>, vector<6x8x8xf32>,
    return
  }
  func.func @transform_0(%arg0: i32) -> (i32, i32, i32) {
    %c0_i32 = arith.constant 0 : i32
    %c0_i32_0 = arith.constant 0 : i32
    %c0_i32_1 = arith.constant 0 : i32
    return %arg0, %c0_i32, %c0_i32_0 : i32, i32, i32
  }
  func.func @transform_1(%arg0: i32) -> (i32, i32, i32) {
    %c0_i32 = arith.constant 0 : i32
    %c0_i32_0 = arith.constant 0 : i32
    %c0_i32_1 = arith.constant 0 : i32
    return %arg0, %c0_i32, %c0_i32_0 : i32, i32, i32
  }
}

module attributes {stable_mosaic.version = 11 : i64} {
  func.func @_gauss5x5_kernel(%arg0: i32, %arg1: memref<6x16x16xf32, #tpu.memory_space<vmem>>, %arg2: memref<6x16x16xf32, #tpu.memory_space<vmem>>, %arg3: memref<6x20x16xf32, #tpu.memory_space<vmem>>, %arg4: memref<6x16x20xf32, #tpu.memory_space<vmem>>) attributes {dimension_semantics = [#tpu.dimension_semantics<parallel>], iteration_bounds = array<i64: 1>, scalar_prefetch = 0 : i64, scratch_operands = 2 : i64, tpu.core_type = #tpu.core_type<tc>, window_params = [{transform_indices = @transform_0, window_bounds = array<i64: 6, 16, 16>}, {transform_indices = @transform_1, window_bounds = array<i64: 6, 16, 16>}]} {
    %c0 = arith.constant 0 : index
    %c0_0 = arith.constant 0 : index
    %c0_1 = arith.constant 0 : index
    %0 = vector.load %arg1[%c0, %c0_0, %c0_1] : memref<6x16x16xf32, #tpu.memory_space<vmem>>, vector<6x16x16xf32>
    %c0_2 = arith.constant 0 : index
    %c2 = arith.constant 2 : index
    %c0_3 = arith.constant 0 : index
    %1 = vector.load %arg3[%c0_2, %c2, %c0_3] : memref<6x20x16xf32, #tpu.memory_space<vmem>>, vector<6x16x16xf32>
    tpu.vector_store %arg3[%c0_2, %c2, %c0_3], %0 {strides = array<i32>} : memref<6x20x16xf32, #tpu.memory_space<vmem>>, vector<6x16x16xf32>,
    %2 = vector.extract_strided_slice %0 {offsets = [0, 2, 0], sizes = [6, 1, 16], strides = [1, 1, 1]} : vector<6x16x16xf32> to vector<6x1x16xf32>
    %c0_4 = arith.constant 0 : index
    %c0_5 = arith.constant 0 : index
    %c0_6 = arith.constant 0 : index
    %3 = vector.load %arg3[%c0_4, %c0_5, %c0_6] : memref<6x20x16xf32, #tpu.memory_space<vmem>>, vector<6x1x16xf32>
    tpu.vector_store %arg3[%c0_4, %c0_5, %c0_6], %2 {strides = array<i32>} : memref<6x20x16xf32, #tpu.memory_space<vmem>>, vector<6x1x16xf32>,
    %4 = vector.extract_strided_slice %0 {offsets = [0, 1, 0], sizes = [6, 1, 16], strides = [1, 1, 1]} : vector<6x16x16xf32> to vector<6x1x16xf32>
    %c0_7 = arith.constant 0 : index
    %c1 = arith.constant 1 : index
    %c0_8 = arith.constant 0 : index
    %5 = vector.load %arg3[%c0_7, %c1, %c0_8] : memref<6x20x16xf32, #tpu.memory_space<vmem>>, vector<6x1x16xf32>
    tpu.vector_store %arg3[%c0_7, %c1, %c0_8], %4 {strides = array<i32>} : memref<6x20x16xf32, #tpu.memory_space<vmem>>, vector<6x1x16xf32>,
    %6 = vector.extract_strided_slice %0 {offsets = [0, 14, 0], sizes = [6, 1, 16], strides = [1, 1, 1]} : vector<6x16x16xf32> to vector<6x1x16xf32>
    %c0_9 = arith.constant 0 : index
    %c18 = arith.constant 18 : index
    %c0_10 = arith.constant 0 : index
    %7 = vector.load %arg3[%c0_9, %c18, %c0_10] : memref<6x20x16xf32, #tpu.memory_space<vmem>>, vector<6x1x16xf32>
    tpu.vector_store %arg3[%c0_9, %c18, %c0_10], %6 {strides = array<i32>} : memref<6x20x16xf32, #tpu.memory_space<vmem>>, vector<6x1x16xf32>,
    %8 = vector.extract_strided_slice %0 {offsets = [0, 13, 0], sizes = [6, 1, 16], strides = [1, 1, 1]} : vector<6x16x16xf32> to vector<6x1x16xf32>
    %c0_11 = arith.constant 0 : index
    %c19 = arith.constant 19 : index
    %c0_12 = arith.constant 0 : index
    %9 = vector.load %arg3[%c0_11, %c19, %c0_12] : memref<6x20x16xf32, #tpu.memory_space<vmem>>, vector<6x1x16xf32>
    tpu.vector_store %arg3[%c0_11, %c19, %c0_12], %8 {strides = array<i32>} : memref<6x20x16xf32, #tpu.memory_space<vmem>>, vector<6x1x16xf32>,
    %c0_13 = arith.constant 0 : index
    %c0_14 = arith.constant 0 : index
    %c0_15 = arith.constant 0 : index
    %10 = vector.load %arg3[%c0_13, %c0_14, %c0_15] : memref<6x20x16xf32, #tpu.memory_space<vmem>>, vector<6x16x16xf32>
    %c0_16 = arith.constant 0 : index
    %c4 = arith.constant 4 : index
    %c0_17 = arith.constant 0 : index
    %11 = vector.load %arg3[%c0_16, %c4, %c0_17] : memref<6x20x16xf32, #tpu.memory_space<vmem>>, vector<6x16x16xf32>
    %12 = arith.addf %10, %11 : vector<6x16x16xf32>
    %c0_18 = arith.constant 0 : index
    %c1_19 = arith.constant 1 : index
    %c0_20 = arith.constant 0 : index
    %13 = vector.load %arg3[%c0_18, %c1_19, %c0_20] : memref<6x20x16xf32, #tpu.memory_space<vmem>>, vector<6x16x16xf32>
    %c0_21 = arith.constant 0 : index
    %c3 = arith.constant 3 : index
    %c0_22 = arith.constant 0 : index
    %14 = vector.load %arg3[%c0_21, %c3, %c0_22] : memref<6x20x16xf32, #tpu.memory_space<vmem>>, vector<6x16x16xf32>
    %15 = arith.addf %13, %14 : vector<6x16x16xf32>
    %cst = arith.constant 4.000000e+00 : f32
    %16 = vector.broadcast %cst : f32 to vector<6x16x16xf32>
    %17 = arith.mulf %16, %15 : vector<6x16x16xf32>
    %18 = arith.addf %12, %17 : vector<6x16x16xf32>
    %c0_23 = arith.constant 0 : index
    %c2_24 = arith.constant 2 : index
    %c0_25 = arith.constant 0 : index
    %19 = vector.load %arg3[%c0_23, %c2_24, %c0_25] : memref<6x20x16xf32, #tpu.memory_space<vmem>>, vector<6x16x16xf32>
    %cst_26 = arith.constant 6.000000e+00 : f32
    %20 = vector.broadcast %cst_26 : f32 to vector<6x16x16xf32>
    %21 = arith.mulf %20, %19 : vector<6x16x16xf32>
    %22 = arith.addf %18, %21 : vector<6x16x16xf32>
    %c0_27 = arith.constant 0 : index
    %c0_28 = arith.constant 0 : index
    %c2_29 = arith.constant 2 : index
    %23 = vector.load %arg4[%c0_27, %c0_28, %c2_29] : memref<6x16x20xf32, #tpu.memory_space<vmem>>, vector<6x16x16xf32>
    tpu.vector_store %arg4[%c0_27, %c0_28, %c2_29], %22 {strides = array<i32>} : memref<6x16x20xf32, #tpu.memory_space<vmem>>, vector<6x16x16xf32>,
    %24 = vector.extract_strided_slice %22 {offsets = [0, 0, 2], sizes = [6, 16, 1], strides = [1, 1, 1]} : vector<6x16x16xf32> to vector<6x16x1xf32>
    %c0_30 = arith.constant 0 : index
    %c0_31 = arith.constant 0 : index
    %c0_32 = arith.constant 0 : index
    %25 = vector.load %arg4[%c0_30, %c0_31, %c0_32] : memref<6x16x20xf32, #tpu.memory_space<vmem>>, vector<6x16x1xf32>
    tpu.vector_store %arg4[%c0_30, %c0_31, %c0_32], %24 {strides = array<i32>} : memref<6x16x20xf32, #tpu.memory_space<vmem>>, vector<6x16x1xf32>,
    %26 = vector.extract_strided_slice %22 {offsets = [0, 0, 1], sizes = [6, 16, 1], strides = [1, 1, 1]} : vector<6x16x16xf32> to vector<6x16x1xf32>
    %c0_33 = arith.constant 0 : index
    %c0_34 = arith.constant 0 : index
    %c1_35 = arith.constant 1 : index
    %27 = vector.load %arg4[%c0_33, %c0_34, %c1_35] : memref<6x16x20xf32, #tpu.memory_space<vmem>>, vector<6x16x1xf32>
    tpu.vector_store %arg4[%c0_33, %c0_34, %c1_35], %26 {strides = array<i32>} : memref<6x16x20xf32, #tpu.memory_space<vmem>>, vector<6x16x1xf32>,
    %28 = vector.extract_strided_slice %22 {offsets = [0, 0, 14], sizes = [6, 16, 1], strides = [1, 1, 1]} : vector<6x16x16xf32> to vector<6x16x1xf32>
    %c0_36 = arith.constant 0 : index
    %c0_37 = arith.constant 0 : index
    %c18_38 = arith.constant 18 : index
    %29 = vector.load %arg4[%c0_36, %c0_37, %c18_38] : memref<6x16x20xf32, #tpu.memory_space<vmem>>, vector<6x16x1xf32>
    tpu.vector_store %arg4[%c0_36, %c0_37, %c18_38], %28 {strides = array<i32>} : memref<6x16x20xf32, #tpu.memory_space<vmem>>, vector<6x16x1xf32>,
    %30 = vector.extract_strided_slice %22 {offsets = [0, 0, 13], sizes = [6, 16, 1], strides = [1, 1, 1]} : vector<6x16x16xf32> to vector<6x16x1xf32>
    %c0_39 = arith.constant 0 : index
    %c0_40 = arith.constant 0 : index
    %c19_41 = arith.constant 19 : index
    %31 = vector.load %arg4[%c0_39, %c0_40, %c19_41] : memref<6x16x20xf32, #tpu.memory_space<vmem>>, vector<6x16x1xf32>
    tpu.vector_store %arg4[%c0_39, %c0_40, %c19_41], %30 {strides = array<i32>} : memref<6x16x20xf32, #tpu.memory_space<vmem>>, vector<6x16x1xf32>,
    %c0_42 = arith.constant 0 : index
    %c0_43 = arith.constant 0 : index
    %c0_44 = arith.constant 0 : index
    %32 = vector.load %arg4[%c0_42, %c0_43, %c0_44] : memref<6x16x20xf32, #tpu.memory_space<vmem>>, vector<6x16x16xf32>
    %c0_45 = arith.constant 0 : index
    %c0_46 = arith.constant 0 : index
    %c4_47 = arith.constant 4 : index
    %33 = vector.load %arg4[%c0_45, %c0_46, %c4_47] : memref<6x16x20xf32, #tpu.memory_space<vmem>>, vector<6x16x16xf32>
    %34 = arith.addf %32, %33 : vector<6x16x16xf32>
    %c0_48 = arith.constant 0 : index
    %c0_49 = arith.constant 0 : index
    %c1_50 = arith.constant 1 : index
    %35 = vector.load %arg4[%c0_48, %c0_49, %c1_50] : memref<6x16x20xf32, #tpu.memory_space<vmem>>, vector<6x16x16xf32>
    %c0_51 = arith.constant 0 : index
    %c0_52 = arith.constant 0 : index
    %c3_53 = arith.constant 3 : index
    %36 = vector.load %arg4[%c0_51, %c0_52, %c3_53] : memref<6x16x20xf32, #tpu.memory_space<vmem>>, vector<6x16x16xf32>
    %37 = arith.addf %35, %36 : vector<6x16x16xf32>
    %cst_54 = arith.constant 4.000000e+00 : f32
    %38 = vector.broadcast %cst_54 : f32 to vector<6x16x16xf32>
    %39 = arith.mulf %38, %37 : vector<6x16x16xf32>
    %40 = arith.addf %34, %39 : vector<6x16x16xf32>
    %c0_55 = arith.constant 0 : index
    %c0_56 = arith.constant 0 : index
    %c2_57 = arith.constant 2 : index
    %41 = vector.load %arg4[%c0_55, %c0_56, %c2_57] : memref<6x16x20xf32, #tpu.memory_space<vmem>>, vector<6x16x16xf32>
    %cst_58 = arith.constant 6.000000e+00 : f32
    %42 = vector.broadcast %cst_58 : f32 to vector<6x16x16xf32>
    %43 = arith.mulf %42, %41 : vector<6x16x16xf32>
    %44 = arith.addf %40, %43 : vector<6x16x16xf32>
    %cst_59 = arith.constant 3.906250e-03 : f32
    %45 = vector.broadcast %cst_59 : f32 to vector<6x16x16xf32>
    %46 = arith.mulf %44, %45 : vector<6x16x16xf32>
    %c0_60 = arith.constant 0 : index
    %c0_61 = arith.constant 0 : index
    %c0_62 = arith.constant 0 : index
    %47 = vector.load %arg2[%c0_60, %c0_61, %c0_62] : memref<6x16x16xf32, #tpu.memory_space<vmem>>, vector<6x16x16xf32>
    tpu.vector_store %arg2[%c0_60, %c0_61, %c0_62], %46 {strides = array<i32>} : memref<6x16x16xf32, #tpu.memory_space<vmem>>, vector<6x16x16xf32>,
    return
  }
  func.func @transform_0(%arg0: i32) -> (i32, i32, i32) {
    %c0_i32 = arith.constant 0 : i32
    %c0_i32_0 = arith.constant 0 : i32
    %c0_i32_1 = arith.constant 0 : i32
    return %arg0, %c0_i32, %c0_i32_0 : i32, i32, i32
  }
  func.func @transform_1(%arg0: i32) -> (i32, i32, i32) {
    %c0_i32 = arith.constant 0 : i32
    %c0_i32_0 = arith.constant 0 : i32
    %c0_i32_1 = arith.constant 0 : i32
    return %arg0, %c0_i32, %c0_i32_0 : i32, i32, i32
  }
}

module attributes {stable_mosaic.version = 11 : i64} {
  func.func @_gauss5x5_kernel(%arg0: i32, %arg1: memref<6x4x4xf32, #tpu.memory_space<vmem>>, %arg2: memref<6x4x4xf32, #tpu.memory_space<vmem>>, %arg3: memref<6x8x4xf32, #tpu.memory_space<vmem>>, %arg4: memref<6x4x8xf32, #tpu.memory_space<vmem>>) attributes {dimension_semantics = [#tpu.dimension_semantics<parallel>], iteration_bounds = array<i64: 1>, scalar_prefetch = 0 : i64, scratch_operands = 2 : i64, tpu.core_type = #tpu.core_type<tc>, window_params = [{transform_indices = @transform_0, window_bounds = array<i64: 6, 4, 4>}, {transform_indices = @transform_1, window_bounds = array<i64: 6, 4, 4>}]} {
    %c0 = arith.constant 0 : index
    %c0_0 = arith.constant 0 : index
    %c0_1 = arith.constant 0 : index
    %0 = vector.load %arg1[%c0, %c0_0, %c0_1] : memref<6x4x4xf32, #tpu.memory_space<vmem>>, vector<6x4x4xf32>
    %c0_2 = arith.constant 0 : index
    %c2 = arith.constant 2 : index
    %c0_3 = arith.constant 0 : index
    %1 = vector.load %arg3[%c0_2, %c2, %c0_3] : memref<6x8x4xf32, #tpu.memory_space<vmem>>, vector<6x4x4xf32>
    tpu.vector_store %arg3[%c0_2, %c2, %c0_3], %0 {strides = array<i32>} : memref<6x8x4xf32, #tpu.memory_space<vmem>>, vector<6x4x4xf32>,
    %2 = vector.extract_strided_slice %0 {offsets = [0, 2, 0], sizes = [6, 1, 4], strides = [1, 1, 1]} : vector<6x4x4xf32> to vector<6x1x4xf32>
    %c0_4 = arith.constant 0 : index
    %c0_5 = arith.constant 0 : index
    %c0_6 = arith.constant 0 : index
    %3 = vector.load %arg3[%c0_4, %c0_5, %c0_6] : memref<6x8x4xf32, #tpu.memory_space<vmem>>, vector<6x1x4xf32>
    tpu.vector_store %arg3[%c0_4, %c0_5, %c0_6], %2 {strides = array<i32>} : memref<6x8x4xf32, #tpu.memory_space<vmem>>, vector<6x1x4xf32>,
    %4 = vector.extract_strided_slice %0 {offsets = [0, 1, 0], sizes = [6, 1, 4], strides = [1, 1, 1]} : vector<6x4x4xf32> to vector<6x1x4xf32>
    %c0_7 = arith.constant 0 : index
    %c1 = arith.constant 1 : index
    %c0_8 = arith.constant 0 : index
    %5 = vector.load %arg3[%c0_7, %c1, %c0_8] : memref<6x8x4xf32, #tpu.memory_space<vmem>>, vector<6x1x4xf32>
    tpu.vector_store %arg3[%c0_7, %c1, %c0_8], %4 {strides = array<i32>} : memref<6x8x4xf32, #tpu.memory_space<vmem>>, vector<6x1x4xf32>,
    %6 = vector.extract_strided_slice %0 {offsets = [0, 2, 0], sizes = [6, 1, 4], strides = [1, 1, 1]} : vector<6x4x4xf32> to vector<6x1x4xf32>
    %c0_9 = arith.constant 0 : index
    %c6 = arith.constant 6 : index
    %c0_10 = arith.constant 0 : index
    %7 = vector.load %arg3[%c0_9, %c6, %c0_10] : memref<6x8x4xf32, #tpu.memory_space<vmem>>, vector<6x1x4xf32>
    tpu.vector_store %arg3[%c0_9, %c6, %c0_10], %6 {strides = array<i32>} : memref<6x8x4xf32, #tpu.memory_space<vmem>>, vector<6x1x4xf32>,
    %8 = vector.extract_strided_slice %0 {offsets = [0, 1, 0], sizes = [6, 1, 4], strides = [1, 1, 1]} : vector<6x4x4xf32> to vector<6x1x4xf32>
    %c0_11 = arith.constant 0 : index
    %c7 = arith.constant 7 : index
    %c0_12 = arith.constant 0 : index
    %9 = vector.load %arg3[%c0_11, %c7, %c0_12] : memref<6x8x4xf32, #tpu.memory_space<vmem>>, vector<6x1x4xf32>
    tpu.vector_store %arg3[%c0_11, %c7, %c0_12], %8 {strides = array<i32>} : memref<6x8x4xf32, #tpu.memory_space<vmem>>, vector<6x1x4xf32>,
    %c0_13 = arith.constant 0 : index
    %c0_14 = arith.constant 0 : index
    %c0_15 = arith.constant 0 : index
    %10 = vector.load %arg3[%c0_13, %c0_14, %c0_15] : memref<6x8x4xf32, #tpu.memory_space<vmem>>, vector<6x4x4xf32>
    %c0_16 = arith.constant 0 : index
    %c4 = arith.constant 4 : index
    %c0_17 = arith.constant 0 : index
    %11 = vector.load %arg3[%c0_16, %c4, %c0_17] : memref<6x8x4xf32, #tpu.memory_space<vmem>>, vector<6x4x4xf32>
    %12 = arith.addf %10, %11 : vector<6x4x4xf32>
    %c0_18 = arith.constant 0 : index
    %c1_19 = arith.constant 1 : index
    %c0_20 = arith.constant 0 : index
    %13 = vector.load %arg3[%c0_18, %c1_19, %c0_20] : memref<6x8x4xf32, #tpu.memory_space<vmem>>, vector<6x4x4xf32>
    %c0_21 = arith.constant 0 : index
    %c3 = arith.constant 3 : index
    %c0_22 = arith.constant 0 : index
    %14 = vector.load %arg3[%c0_21, %c3, %c0_22] : memref<6x8x4xf32, #tpu.memory_space<vmem>>, vector<6x4x4xf32>
    %15 = arith.addf %13, %14 : vector<6x4x4xf32>
    %cst = arith.constant 4.000000e+00 : f32
    %16 = vector.broadcast %cst : f32 to vector<6x4x4xf32>
    %17 = arith.mulf %16, %15 : vector<6x4x4xf32>
    %18 = arith.addf %12, %17 : vector<6x4x4xf32>
    %c0_23 = arith.constant 0 : index
    %c2_24 = arith.constant 2 : index
    %c0_25 = arith.constant 0 : index
    %19 = vector.load %arg3[%c0_23, %c2_24, %c0_25] : memref<6x8x4xf32, #tpu.memory_space<vmem>>, vector<6x4x4xf32>
    %cst_26 = arith.constant 6.000000e+00 : f32
    %20 = vector.broadcast %cst_26 : f32 to vector<6x4x4xf32>
    %21 = arith.mulf %20, %19 : vector<6x4x4xf32>
    %22 = arith.addf %18, %21 : vector<6x4x4xf32>
    %c0_27 = arith.constant 0 : index
    %c0_28 = arith.constant 0 : index
    %c2_29 = arith.constant 2 : index
    %23 = vector.load %arg4[%c0_27, %c0_28, %c2_29] : memref<6x4x8xf32, #tpu.memory_space<vmem>>, vector<6x4x4xf32>
    tpu.vector_store %arg4[%c0_27, %c0_28, %c2_29], %22 {strides = array<i32>} : memref<6x4x8xf32, #tpu.memory_space<vmem>>, vector<6x4x4xf32>,
    %24 = vector.extract_strided_slice %22 {offsets = [0, 0, 2], sizes = [6, 4, 1], strides = [1, 1, 1]} : vector<6x4x4xf32> to vector<6x4x1xf32>
    %c0_30 = arith.constant 0 : index
    %c0_31 = arith.constant 0 : index
    %c0_32 = arith.constant 0 : index
    %25 = vector.load %arg4[%c0_30, %c0_31, %c0_32] : memref<6x4x8xf32, #tpu.memory_space<vmem>>, vector<6x4x1xf32>
    tpu.vector_store %arg4[%c0_30, %c0_31, %c0_32], %24 {strides = array<i32>} : memref<6x4x8xf32, #tpu.memory_space<vmem>>, vector<6x4x1xf32>,
    %26 = vector.extract_strided_slice %22 {offsets = [0, 0, 1], sizes = [6, 4, 1], strides = [1, 1, 1]} : vector<6x4x4xf32> to vector<6x4x1xf32>
    %c0_33 = arith.constant 0 : index
    %c0_34 = arith.constant 0 : index
    %c1_35 = arith.constant 1 : index
    %27 = vector.load %arg4[%c0_33, %c0_34, %c1_35] : memref<6x4x8xf32, #tpu.memory_space<vmem>>, vector<6x4x1xf32>
    tpu.vector_store %arg4[%c0_33, %c0_34, %c1_35], %26 {strides = array<i32>} : memref<6x4x8xf32, #tpu.memory_space<vmem>>, vector<6x4x1xf32>,
    %28 = vector.extract_strided_slice %22 {offsets = [0, 0, 2], sizes = [6, 4, 1], strides = [1, 1, 1]} : vector<6x4x4xf32> to vector<6x4x1xf32>
    %c0_36 = arith.constant 0 : index
    %c0_37 = arith.constant 0 : index
    %c6_38 = arith.constant 6 : index
    %29 = vector.load %arg4[%c0_36, %c0_37, %c6_38] : memref<6x4x8xf32, #tpu.memory_space<vmem>>, vector<6x4x1xf32>
    tpu.vector_store %arg4[%c0_36, %c0_37, %c6_38], %28 {strides = array<i32>} : memref<6x4x8xf32, #tpu.memory_space<vmem>>, vector<6x4x1xf32>,
    %30 = vector.extract_strided_slice %22 {offsets = [0, 0, 1], sizes = [6, 4, 1], strides = [1, 1, 1]} : vector<6x4x4xf32> to vector<6x4x1xf32>
    %c0_39 = arith.constant 0 : index
    %c0_40 = arith.constant 0 : index
    %c7_41 = arith.constant 7 : index
    %31 = vector.load %arg4[%c0_39, %c0_40, %c7_41] : memref<6x4x8xf32, #tpu.memory_space<vmem>>, vector<6x4x1xf32>
    tpu.vector_store %arg4[%c0_39, %c0_40, %c7_41], %30 {strides = array<i32>} : memref<6x4x8xf32, #tpu.memory_space<vmem>>, vector<6x4x1xf32>,
    %c0_42 = arith.constant 0 : index
    %c0_43 = arith.constant 0 : index
    %c0_44 = arith.constant 0 : index
    %32 = vector.load %arg4[%c0_42, %c0_43, %c0_44] : memref<6x4x8xf32, #tpu.memory_space<vmem>>, vector<6x4x4xf32>
    %c0_45 = arith.constant 0 : index
    %c0_46 = arith.constant 0 : index
    %c4_47 = arith.constant 4 : index
    %33 = vector.load %arg4[%c0_45, %c0_46, %c4_47] : memref<6x4x8xf32, #tpu.memory_space<vmem>>, vector<6x4x4xf32>
    %34 = arith.addf %32, %33 : vector<6x4x4xf32>
    %c0_48 = arith.constant 0 : index
    %c0_49 = arith.constant 0 : index
    %c1_50 = arith.constant 1 : index
    %35 = vector.load %arg4[%c0_48, %c0_49, %c1_50] : memref<6x4x8xf32, #tpu.memory_space<vmem>>, vector<6x4x4xf32>
    %c0_51 = arith.constant 0 : index
    %c0_52 = arith.constant 0 : index
    %c3_53 = arith.constant 3 : index
    %36 = vector.load %arg4[%c0_51, %c0_52, %c3_53] : memref<6x4x8xf32, #tpu.memory_space<vmem>>, vector<6x4x4xf32>
    %37 = arith.addf %35, %36 : vector<6x4x4xf32>
    %cst_54 = arith.constant 4.000000e+00 : f32
    %38 = vector.broadcast %cst_54 : f32 to vector<6x4x4xf32>
    %39 = arith.mulf %38, %37 : vector<6x4x4xf32>
    %40 = arith.addf %34, %39 : vector<6x4x4xf32>
    %c0_55 = arith.constant 0 : index
    %c0_56 = arith.constant 0 : index
    %c2_57 = arith.constant 2 : index
    %41 = vector.load %arg4[%c0_55, %c0_56, %c2_57] : memref<6x4x8xf32, #tpu.memory_space<vmem>>, vector<6x4x4xf32>
    %cst_58 = arith.constant 6.000000e+00 : f32
    %42 = vector.broadcast %cst_58 : f32 to vector<6x4x4xf32>
    %43 = arith.mulf %42, %41 : vector<6x4x4xf32>
    %44 = arith.addf %40, %43 : vector<6x4x4xf32>
    %cst_59 = arith.constant 3.906250e-03 : f32
    %45 = vector.broadcast %cst_59 : f32 to vector<6x4x4xf32>
    %46 = arith.mulf %44, %45 : vector<6x4x4xf32>
    %c0_60 = arith.constant 0 : index
    %c0_61 = arith.constant 0 : index
    %c0_62 = arith.constant 0 : index
    %47 = vector.load %arg2[%c0_60, %c0_61, %c0_62] : memref<6x4x4xf32, #tpu.memory_space<vmem>>, vector<6x4x4xf32>
    tpu.vector_store %arg2[%c0_60, %c0_61, %c0_62], %46 {strides = array<i32>} : memref<6x4x4xf32, #tpu.memory_space<vmem>>, vector<6x4x4xf32>,
    return
  }
  func.func @transform_0(%arg0: i32) -> (i32, i32, i32) {
    %c0_i32 = arith.constant 0 : i32
    %c0_i32_0 = arith.constant 0 : i32
    %c0_i32_1 = arith.constant 0 : i32
    return %arg0, %c0_i32, %c0_i32_0 : i32, i32, i32
  }
  func.func @transform_1(%arg0: i32) -> (i32, i32, i32) {
    %c0_i32 = arith.constant 0 : i32
    %c0_i32_0 = arith.constant 0 : i32
    %c0_i32_1 = arith.constant 0 : i32
    return %arg0, %c0_i32, %c0_i32_0 : i32, i32, i32
  }
}

</mosaic_0001>

<llo_original>
// kernel: gauss_pyramid_conv.4
$region0: #{gauss_pyramid_conv.4}
  #allocation0 [shape = 'u32[]', space=smem, size = 0x4, offset = 0x4, fixed_abs, tag = 'smem constant byte address 0x4 - core index']
  #allocation1 [shape = 'u32[144,128]{1,0:T(1,128)}', space=vmem, size = 0x12000, scoped, tag = 'internal scratch']
  #allocation2 [shape = 'f32[6,12,8]{2,1,0:T(8,128)}', space=vmem, size = 0xc000, scoped, tag = 'scratch operand']
  #allocation3 [shape = 'f32[6,8,12]{2,1,0:T(8,128)}', space=vmem, size = 0x6000, scoped, tag = 'scratch operand']
  %s0 = inlined_call_operand.vmem [shape: f32[6,8,8], index: 0, kind: input, shape index: {}]
  %s1 = inlined_call_operand.vmem [shape: f32[6,8,8], index: 1, kind: output, shape index: {}]
  %s2 = sld [smem:[#allocation0]]
  $region14: #{gauss_pyramid_conv.4} parent=0
    _
  %s4 = ssub.s32 1, %s2
  %s5 = scalar_select 0, %s4, %s2
  // Predicated region
  $region2: #{gauss_pyramid_conv.4} parent=0 // pred_check
    _
  $region3: #{gauss_pyramid_conv.4} parent=0 // pred_check_branch
    %7 = sbr.rel (0) target = $region5
  $region4: #{gauss_pyramid_conv.4} parent=0 // pred_region
    _
  $region5: #{gauss_pyramid_conv.4} parent=0 // pred_fallthru
    _
  %v8 = vld [vmem:[%s0] sm:$0xff]
  %v9 = vld [vmem:[%s0 + $0x8] sm:$0xff]
  %v10 = vld [vmem:[%s0 + $0x10] sm:$0xff]
  %v11 = vld [vmem:[%s0 + $0x18] sm:$0xff]
  %v12 = vld [vmem:[%s0 + $0x20] sm:$0xff]
  %v13 = vld [vmem:[%s0 + $0x28] sm:$0xff]
  %vm14 = vcmask 64512
  %15 = vst.msk [vmem:[#allocation2 + $0x2] sm:$0xff] %vm14, %v8
  %16 = vst.msk [vmem:[#allocation2 + $0x12] sm:$0xff] %vm14, %v9
  %17 = vst.msk [vmem:[#allocation2 + $0x22] sm:$0xff] %vm14, %v10
  %18 = vst.msk [vmem:[#allocation2 + $0x32] sm:$0xff] %vm14, %v11
  %19 = vst.msk [vmem:[#allocation2 + $0x42] sm:$0xff] %vm14, %v12
  %20 = vst.msk [vmem:[#allocation2 + $0x52] sm:$0xff] %vm14, %v13
  %vm21 = vcmask 59394
  %22 = vst.msk [vmem:[#allocation2 - $0x2] sm:$0x4] %vm21, %v8
  %23 = vst.msk [vmem:[#allocation2 + $0xe] sm:$0x4] %vm21, %v9
  %24 = vst.msk [vmem:[#allocation2 + $0x1e] sm:$0x4] %vm21, %v10
  %25 = vst.msk [vmem:[#allocation2 + $0x2e] sm:$0x4] %vm21, %v11
  %26 = vst.msk [vmem:[#allocation2 + $0x3e] sm:$0x4] %vm21, %v12
  %27 = vst.msk [vmem:[#allocation2 + $0x4e] sm:$0x4] %vm21, %v13
  %vm28 = vcmask 58369
  %29 = vst.msk [vmem:[#allocation2] sm:$0x2] %vm28, %v8
  %30 = vst.msk [vmem:[#allocation2 + $0x10] sm:$0x2] %vm28, %v9
  %31 = vst.msk [vmem:[#allocation2 + $0x20] sm:$0x2] %vm28, %v10
  %32 = vst.msk [vmem:[#allocation2 + $0x30] sm:$0x2] %vm28, %v11
  %33 = vst.msk [vmem:[#allocation2 + $0x40] sm:$0x2] %vm28, %v12
  %34 = vst.msk [vmem:[#allocation2 + $0x50] sm:$0x2] %vm28, %v13
  %vm35 = vcmask 63494
  %36 = vst.msk [vmem:[#allocation2 + $0x4] sm:$0x40] %vm35, %v8
  %37 = vst.msk [vmem:[#allocation2 + $0x14] sm:$0x40] %vm35, %v9
  %38 = vst.msk [vmem:[#allocation2 + $0x24] sm:$0x40] %vm35, %v10
  %39 = vst.msk [vmem:[#allocation2 + $0x34] sm:$0x40] %vm35, %v11
  %40 = vst.msk [vmem:[#allocation2 + $0x44] sm:$0x40] %vm35, %v12
  %41 = vst.msk [vmem:[#allocation2 + $0x54] sm:$0x40] %vm35, %v13
  %vm42 = vcmask 62469
  %43 = vst.msk [vmem:[#allocation2 + $0x6] sm:$0x20] %vm42, %v8
  %44 = vst.msk [vmem:[#allocation2 + $0x16] sm:$0x20] %vm42, %v9
  %45 = vst.msk [vmem:[#allocation2 + $0x26] sm:$0x20] %vm42, %v10
  %46 = vst.msk [vmem:[#allocation2 + $0x36] sm:$0x20] %vm42, %v11
  %47 = vst.msk [vmem:[#allocation2 + $0x46] sm:$0x20] %vm42, %v12
  %48 = vst.msk [vmem:[#allocation2 + $0x56] sm:$0x20] %vm42, %v13
  %v49 = vld [vmem:[#allocation2] sm:$0xff]
  %v50 = vld [vmem:[#allocation2 + $0x10] sm:$0xff]
  %v51 = vld [vmem:[#allocation2 + $0x20] sm:$0xff]
  %v52 = vld [vmem:[#allocation2 + $0x30] sm:$0xff]
  %v53 = vld [vmem:[#allocation2 + $0x40] sm:$0xff]
  %v54 = vld [vmem:[#allocation2 + $0x50] sm:$0xff]
  %v55 = vld [vmem:[#allocation2 + $0x4] sm:$0xff]
  %v56 = vld [vmem:[#allocation2 + $0x14] sm:$0xff]
  %v57 = vld [vmem:[#allocation2 + $0x24] sm:$0xff]
  %v58 = vld [vmem:[#allocation2 + $0x34] sm:$0xff]
  %v59 = vld [vmem:[#allocation2 + $0x44] sm:$0xff]
  %v60 = vld [vmem:[#allocation2 + $0x54] sm:$0xff]
  %v61 = vadd.f32 %v49, %v55
  %v62 = vadd.f32 %v50, %v56
  %v63 = vadd.f32 %v51, %v57
  %v64 = vadd.f32 %v52, %v58
  %v65 = vadd.f32 %v53, %v59
  %v66 = vadd.f32 %v54, %v60
  %v67 = vld [vmem:[#allocation2 + $0x1] sm:$0xff]
  %v68 = vld [vmem:[#allocation2 + $0x11] sm:$0xff]
  %v69 = vld [vmem:[#allocation2 + $0x21] sm:$0xff]
  %v70 = vld [vmem:[#allocation2 + $0x31] sm:$0xff]
  %v71 = vld [vmem:[#allocation2 + $0x41] sm:$0xff]
  %v72 = vld [vmem:[#allocation2 + $0x51] sm:$0xff]
  %v73 = vld [vmem:[#allocation2 + $0x3] sm:$0xff]
  %v74 = vld [vmem:[#allocation2 + $0x13] sm:$0xff]
  %v75 = vld [vmem:[#allocation2 + $0x23] sm:$0xff]
  %v76 = vld [vmem:[#allocation2 + $0x33] sm:$0xff]
  %v77 = vld [vmem:[#allocation2 + $0x43] sm:$0xff]
  %v78 = vld [vmem:[#allocation2 + $0x53] sm:$0xff]
  %v79 = vadd.f32 %v67, %v73
  %v80 = vadd.f32 %v68, %v74
  %v81 = vadd.f32 %v69, %v75
  %v82 = vadd.f32 %v70, %v76
  %v83 = vadd.f32 %v71, %v77
  %v84 = vadd.f32 %v72, %v78
  %v85 = vmul.f32 %v79, 4.0
  %v86 = vmul.f32 %v80, 4.0
  %v87 = vmul.f32 %v81, 4.0
  %v88 = vmul.f32 %v82, 4.0
  %v89 = vmul.f32 %v83, 4.0
  %v90 = vmul.f32 %v84, 4.0
  %v91 = vadd.f32 %v61, %v85
  %v92 = vadd.f32 %v62, %v86
  %v93 = vadd.f32 %v63, %v87
  %v94 = vadd.f32 %v64, %v88
  %v95 = vadd.f32 %v65, %v89
  %v96 = vadd.f32 %v66, %v90
  %v97 = vld [vmem:[#allocation2 + $0x2] sm:$0xff]
  %v98 = vld [vmem:[#allocation2 + $0x12] sm:$0xff]
  %v99 = vld [vmem:[#allocation2 + $0x22] sm:$0xff]
  %v100 = vld [vmem:[#allocation2 + $0x32] sm:$0xff]
  %v101 = vld [vmem:[#allocation2 + $0x42] sm:$0xff]
  %v102 = vld [vmem:[#allocation2 + $0x52] sm:$0xff]
  %v103 = vmul.f32 %v97, 6.0
  %v104 = vmul.f32 %v98, 6.0
  %v105 = vmul.f32 %v99, 6.0
  %v106 = vmul.f32 %v100, 6.0
  %v107 = vmul.f32 %v101, 6.0
  %v108 = vmul.f32 %v102, 6.0
  %v109 = vadd.f32 %v91, %v103
  %v110 = vadd.f32 %v92, %v104
  %v111 = vadd.f32 %v93, %v105
  %v112 = vadd.f32 %v94, %v106
  %v113 = vadd.f32 %v95, %v107
  %v114 = vadd.f32 %v96, %v108
  %121 = vrot.lane.b32.xlu0 %v109, 2
  %v122 = vpop.permute.xlu0 %121
  %123 = vrot.lane.b32.xlu0 %v110, 2
  %v124 = vpop.permute.xlu0 %123
  %125 = vrot.lane.b32.xlu0 %v111, 2
  %v126 = vpop.permute.xlu0 %125
  %127 = vrot.lane.b32.xlu0 %v112, 2
  %v128 = vpop.permute.xlu0 %127
  %129 = vrot.lane.b32.xlu0 %v113, 2
  %v130 = vpop.permute.xlu0 %129
  %131 = vrot.lane.b32.xlu0 %v114, 2
  %v132 = vpop.permute.xlu0 %131
  %vm139 = vcmask 80912
  %140 = vst.msk [vmem:[#allocation3] sm:$0xff] %vm139, %v122
  %141 = vst.msk [vmem:[#allocation3 + $0x8] sm:$0xff] %vm139, %v124
  %142 = vst.msk [vmem:[#allocation3 + $0x10] sm:$0xff] %vm139, %v126
  %143 = vst.msk [vmem:[#allocation3 + $0x18] sm:$0xff] %vm139, %v128
  %144 = vst.msk [vmem:[#allocation3 + $0x20] sm:$0xff] %vm139, %v130
  %145 = vst.msk [vmem:[#allocation3 + $0x28] sm:$0xff] %vm139, %v132
  %146 = vrot.lane.b32.xlu0 %v109, 126
  %v147 = vpop.permute.xlu0 %146
  %148 = vrot.lane.b32.xlu0 %v110, 126
  %v149 = vpop.permute.xlu0 %148
  %150 = vrot.lane.b32.xlu0 %v111, 126
  %v151 = vpop.permute.xlu0 %150
  %152 = vrot.lane.b32.xlu0 %v112, 126
  %v153 = vpop.permute.xlu0 %152
  %154 = vrot.lane.b32.xlu0 %v113, 126
  %v155 = vpop.permute.xlu0 %154
  %156 = vrot.lane.b32.xlu0 %v114, 126
  %v157 = vpop.permute.xlu0 %156
  %vm164 = vcmask 7168
  %165 = vst.msk [vmem:[#allocation3] sm:$0xff] %vm164, %v147
  %166 = vst.msk [vmem:[#allocation3 + $0x8] sm:$0xff] %vm164, %v149
  %167 = vst.msk [vmem:[#allocation3 + $0x10] sm:$0xff] %vm164, %v151
  %168 = vst.msk [vmem:[#allocation3 + $0x18] sm:$0xff] %vm164, %v153
  %169 = vst.msk [vmem:[#allocation3 + $0x20] sm:$0xff] %vm164, %v155
  %170 = vst.msk [vmem:[#allocation3 + $0x28] sm:$0xff] %vm164, %v157
  %vm171 = vcmask 15368
  %172 = vst.msk [vmem:[#allocation3] sm:$0xff] %vm171, %v109
  %173 = vst.msk [vmem:[#allocation3 + $0x8] sm:$0xff] %vm171, %v110
  %174 = vst.msk [vmem:[#allocation3 + $0x10] sm:$0xff] %vm171, %v111
  %175 = vst.msk [vmem:[#allocation3 + $0x18] sm:$0xff] %vm171, %v112
  %176 = vst.msk [vmem:[#allocation3 + $0x20] sm:$0xff] %vm171, %v113
  %177 = vst.msk [vmem:[#allocation3 + $0x28] sm:$0xff] %vm171, %v114
  %178 = vrot.lane.b32.xlu0 %v109, 4
  %v179 = vpop.permute.xlu0 %178
  %180 = vrot.lane.b32.xlu0 %v110, 4
  %v181 = vpop.permute.xlu0 %180
  %182 = vrot.lane.b32.xlu0 %v111, 4
  %v183 = vpop.permute.xlu0 %182
  %184 = vrot.lane.b32.xlu0 %v112, 4
  %v185 = vpop.permute.xlu0 %184
  %186 = vrot.lane.b32.xlu0 %v113, 4
  %v187 = vpop.permute.xlu0 %186
  %188 = vrot.lane.b32.xlu0 %v114, 4
  %v189 = vpop.permute.xlu0 %188
  %vm196 = vcmask 89168
  %197 = vst.msk [vmem:[#allocation3] sm:$0xff] %vm196, %v179
  %198 = vst.msk [vmem:[#allocation3 + $0x8] sm:$0xff] %vm196, %v181
  %199 = vst.msk [vmem:[#allocation3 + $0x10] sm:$0xff] %vm196, %v183
  %200 = vst.msk [vmem:[#allocation3 + $0x18] sm:$0xff] %vm196, %v185
  %201 = vst.msk [vmem:[#allocation3 + $0x20] sm:$0xff] %vm196, %v187
  %202 = vst.msk [vmem:[#allocation3 + $0x28] sm:$0xff] %vm196, %v189
  %203 = vrot.lane.b32.xlu0 %v109, 6
  %v204 = vpop.permute.xlu0 %203
  %205 = vrot.lane.b32.xlu0 %v110, 6
  %v206 = vpop.permute.xlu0 %205
  %207 = vrot.lane.b32.xlu0 %v111, 6
  %v208 = vpop.permute.xlu0 %207
  %209 = vrot.lane.b32.xlu0 %v112, 6
  %v210 = vpop.permute.xlu0 %209
  %211 = vrot.lane.b32.xlu0 %v113, 6
  %v212 = vpop.permute.xlu0 %211
  %213 = vrot.lane.b32.xlu0 %v114, 6
  %v214 = vpop.permute.xlu0 %213
  %vm221 = vcmask 97368
  %222 = vst.msk [vmem:[#allocation3] sm:$0xff] %vm221, %v204
  %223 = vst.msk [vmem:[#allocation3 + $0x8] sm:$0xff] %vm221, %v206
  %224 = vst.msk [vmem:[#allocation3 + $0x10] sm:$0xff] %vm221, %v208
  %225 = vst.msk [vmem:[#allocation3 + $0x18] sm:$0xff] %vm221, %v210
  %226 = vst.msk [vmem:[#allocation3 + $0x20] sm:$0xff] %vm221, %v212
  %227 = vst.msk [vmem:[#allocation3 + $0x28] sm:$0xff] %vm221, %v214
  %v228 = vld [vmem:[#allocation3] sm:$0xff]
  %v229 = vld [vmem:[#allocation3 + $0x8] sm:$0xff]
  %v230 = vld [vmem:[#allocation3 + $0x10] sm:$0xff]
  %v231 = vld [vmem:[#allocation3 + $0x18] sm:$0xff]
  %v232 = vld [vmem:[#allocation3 + $0x20] sm:$0xff]
  %v233 = vld [vmem:[#allocation3 + $0x28] sm:$0xff]
  %240 = vrot.lane.b32.xlu0 %v228, 124
  %v241 = vpop.permute.xlu0 %240
  %242 = vrot.lane.b32.xlu0 %v229, 124
  %v243 = vpop.permute.xlu0 %242
  %244 = vrot.lane.b32.xlu0 %v230, 124
  %v245 = vpop.permute.xlu0 %244
  %246 = vrot.lane.b32.xlu0 %v231, 124
  %v247 = vpop.permute.xlu0 %246
  %248 = vrot.lane.b32.xlu0 %v232, 124
  %v249 = vpop.permute.xlu0 %248
  %250 = vrot.lane.b32.xlu0 %v233, 124
  %v251 = vpop.permute.xlu0 %250
  %v258 = vadd.f32 %v228, %v241
  %v259 = vadd.f32 %v229, %v243
  %v260 = vadd.f32 %v230, %v245
  %v261 = vadd.f32 %v231, %v247
  %v262 = vadd.f32 %v232, %v249
  %v263 = vadd.f32 %v233, %v251
  %264 = vrot.lane.b32.xlu0 %v228, 126
  %v265 = vpop.permute.xlu0 %264
  %266 = vrot.lane.b32.xlu0 %v229, 126
  %v267 = vpop.permute.xlu0 %266
  %268 = vrot.lane.b32.xlu0 %v230, 126
  %v269 = vpop.permute.xlu0 %268
  %270 = vrot.lane.b32.xlu0 %v231, 126
  %v271 = vpop.permute.xlu0 %270
  %272 = vrot.lane.b32.xlu0 %v232, 126
  %v273 = vpop.permute.xlu0 %272
  %274 = vrot.lane.b32.xlu0 %v233, 126
  %v275 = vpop.permute.xlu0 %274
  %v282 = vadd.f32 %v228, %v265
  %v283 = vadd.f32 %v229, %v267
  %v284 = vadd.f32 %v230, %v269
  %v285 = vadd.f32 %v231, %v271
  %v286 = vadd.f32 %v232, %v273
  %v287 = vadd.f32 %v233, %v275
  %v288 = vmul.f32 %v282, 4.0
  %v289 = vmul.f32 %v283, 4.0
  %v290 = vmul.f32 %v284, 4.0
  %v291 = vmul.f32 %v285, 4.0
  %v292 = vmul.f32 %v286, 4.0
  %v293 = vmul.f32 %v287, 4.0
  %300 = vrot.lane.b32.xlu0 %v288, 127
  %v301 = vpop.permute.xlu0 %300
  %302 = vrot.lane.b32.xlu0 %v289, 127
  %v303 = vpop.permute.xlu0 %302
  %304 = vrot.lane.b32.xlu0 %v290, 127
  %v305 = vpop.permute.xlu0 %304
  %306 = vrot.lane.b32.xlu0 %v291, 127
  %v307 = vpop.permute.xlu0 %306
  %308 = vrot.lane.b32.xlu0 %v292, 127
  %v309 = vpop.permute.xlu0 %308
  %310 = vrot.lane.b32.xlu0 %v293, 127
  %v311 = vpop.permute.xlu0 %310
  %v318 = vadd.f32 %v258, %v301
  %v319 = vadd.f32 %v259, %v303
  %v320 = vadd.f32 %v260, %v305
  %v321 = vadd.f32 %v261, %v307
  %v322 = vadd.f32 %v262, %v309
  %v323 = vadd.f32 %v263, %v311
  %v324 = vmul.f32 %v228, 6.0
  %v325 = vmul.f32 %v229, 6.0
  %v326 = vmul.f32 %v230, 6.0
  %v327 = vmul.f32 %v231, 6.0
  %v328 = vmul.f32 %v232, 6.0
  %v329 = vmul.f32 %v233, 6.0
  %336 = vrot.lane.b32.xlu0 %v324, 126
  %v337 = vpop.permute.xlu0 %336
  %338 = vrot.lane.b32.xlu0 %v325, 126
  %v339 = vpop.permute.xlu0 %338
  %340 = vrot.lane.b32.xlu0 %v326, 126
  %v341 = vpop.permute.xlu0 %340
  %342 = vrot.lane.b32.xlu0 %v327, 126
  %v343 = vpop.permute.xlu0 %342
  %344 = vrot.lane.b32.xlu0 %v328, 126
  %v345 = vpop.permute.xlu0 %344
  %346 = vrot.lane.b32.xlu0 %v329, 126
  %v347 = vpop.permute.xlu0 %346
  %v354 = vadd.f32 %v318, %v337
  %v355 = vadd.f32 %v319, %v339
  %v356 = vadd.f32 %v320, %v341
  %v357 = vadd.f32 %v321, %v343
  %v358 = vadd.f32 %v322, %v345
  %v359 = vadd.f32 %v323, %v347
  %v360 = vmul.f32 %v354, 0.00390625
  %v361 = vmul.f32 %v355, 0.00390625
  %v362 = vmul.f32 %v356, 0.00390625
  %v363 = vmul.f32 %v357, 0.00390625
  %v364 = vmul.f32 %v358, 0.00390625
  %v365 = vmul.f32 %v359, 0.00390625
  %366 = vst.msk [vmem:[%s1] sm:$0xff] %vm14, %v360
  %367 = vst.msk [vmem:[%s1 + $0x8] sm:$0xff] %vm14, %v361
  %368 = vst.msk [vmem:[%s1 + $0x10] sm:$0xff] %vm14, %v362
  %369 = vst.msk [vmem:[%s1 + $0x18] sm:$0xff] %vm14, %v363
  %370 = vst.msk [vmem:[%s1 + $0x20] sm:$0xff] %vm14, %v364
  %371 = vst.msk [vmem:[%s1 + $0x28] sm:$0xff] %vm14, %v365
  // Predicated region
  $region6: #{gauss_pyramid_conv.4} parent=0 // pred_check
    _
  $region7: #{gauss_pyramid_conv.4} parent=0 // pred_check_branch
    %373 = sbr.rel (0) target = $region9
  $region8: #{gauss_pyramid_conv.4} parent=0 // pred_region
    _
  $region9: #{gauss_pyramid_conv.4} parent=0 // pred_fallthru
    _
  // Predicated region
  $region10: #{gauss_pyramid_conv.4} parent=0 // pred_check
    _
  $region11: #{gauss_pyramid_conv.4} parent=0 // pred_check_branch
    %375 = sbr.rel (0) target = $region13
  $region12: #{gauss_pyramid_conv.4} parent=0 // pred_region
    _
  $region13: #{gauss_pyramid_conv.4} parent=0 // pred_fallthru
    _

// kernel: gauss_pyramid_conv.3
$region0: #{gauss_pyramid_conv.3}
  #allocation0 [shape = 'u32[]', space=smem, size = 0x4, offset = 0x4, fixed_abs, tag = 'smem constant byte address 0x4 - core index']
  #allocation1 [shape = 'u32[144,128]{1,0:T(1,128)}', space=vmem, size = 0x12000, scoped, tag = 'internal scratch']
  #allocation2 [shape = 'f32[6,20,16]{2,1,0:T(8,128)}', space=vmem, size = 0x12000, scoped, tag = 'scratch operand']
  #allocation3 [shape = 'f32[6,16,20]{2,1,0:T(8,128)}', space=vmem, size = 0xc000, scoped, tag = 'scratch operand']
  %s0 = inlined_call_operand.hbm [shape: f32[6,16,16], index: 0, kind: input, shape index: {}]
  %s1 = inlined_call_operand.vmem [shape: f32[6,16,16], index: 1, kind: output, shape index: {}]
  %s2 = sld [smem:[#allocation0]]
  $region18: #{gauss_pyramid_conv.3} parent=0
    _
  %s4 = ssub.s32 1, %s2
  %s5 = scalar_select 0, %s4, %s2
  $region1: #{gauss_pyramid_conv.3} parent=0
    #allocation4 [shape = 'u8[49152]{0}', space=vmem, size = 0xc000, scoped, tag = 'input window, operand 0, single buffered']
    #allocation5 [shape = 's32[1]{0}', space=sflag, size = 0x4, scoped, tag = 'scoped memory for gauss_pyramid_conv.3']
    %6 = vsyncpa [#allocation5], 0
    // Predicated region
    $region2: #{gauss_pyramid_conv.3} parent=1 // pred_check
      _
    $region3: #{gauss_pyramid_conv.3} parent=1 // pred_check_branch
      %8 = sbr.rel (0) target = $region5
    $region4: #{gauss_pyramid_conv.3} parent=1 // pred_region
      %s10 = ssub.s32 1536, 1536
      %11 = vsyncadd [#allocation5], %s10
      %s12 = sshll.u32 [#allocation4], 4
      %s13 = int_to_ptr.vmem [resolvable:$true] %s12
      %18 = dma.hbm_to_vmem [thread:$0]  %s0, 1536, %s13, [#allocation5], 128, 128, 8
    $region5: #{gauss_pyramid_conv.3} parent=1 // pred_fallthru
      _
    // Predicated region
    $region6: #{gauss_pyramid_conv.3} parent=1 // pred_check
      _
    $region7: #{gauss_pyramid_conv.3} parent=1 // pred_check_branch
      %20 = sbr.rel (0) target = $region9
    $region8: #{gauss_pyramid_conv.3} parent=1 // pred_region
      %21 = dma.done [#allocation5], 1536
    $region9: #{gauss_pyramid_conv.3} parent=1 // pred_fallthru
      _
    %v22 = vld [vmem:[#allocation4] sm:$0xff]
    %v23 = vld [vmem:[#allocation4 + $0x8] sm:$0xff]
    %v24 = vld [vmem:[#allocation4 + $0x10] sm:$0xff]
    %v25 = vld [vmem:[#allocation4 + $0x18] sm:$0xff]
    %v26 = vld [vmem:[#allocation4 + $0x20] sm:$0xff]
    %v27 = vld [vmem:[#allocation4 + $0x28] sm:$0xff]
    %v28 = vld [vmem:[#allocation4 + $0x30] sm:$0xff]
    %v29 = vld [vmem:[#allocation4 + $0x38] sm:$0xff]
    %v30 = vld [vmem:[#allocation4 + $0x40] sm:$0xff]
    %v31 = vld [vmem:[#allocation4 + $0x48] sm:$0xff]
    %v32 = vld [vmem:[#allocation4 + $0x50] sm:$0xff]
    %v33 = vld [vmem:[#allocation4 + $0x58] sm:$0xff]
    %vm34 = vcmask 130048
    %35 = vst.msk [vmem:[#allocation2 + $0x2] sm:$0xff] %vm34, %v22
    %36 = vst.msk [vmem:[#allocation2 + $0xa] sm:$0xff] %vm34, %v23
    %37 = vst.msk [vmem:[#allocation2 + $0x1a] sm:$0xff] %vm34, %v24
    %38 = vst.msk [vmem:[#allocation2 + $0x22] sm:$0xff] %vm34, %v25
    %39 = vst.msk [vmem:[#allocation2 + $0x32] sm:$0xff] %vm34, %v26
    %40 = vst.msk [vmem:[#allocation2 + $0x3a] sm:$0xff] %vm34, %v27
    %41 = vst.msk [vmem:[#allocation2 + $0x4a] sm:$0xff] %vm34, %v28
    %42 = vst.msk [vmem:[#allocation2 + $0x52] sm:$0xff] %vm34, %v29
    %43 = vst.msk [vmem:[#allocation2 + $0x62] sm:$0xff] %vm34, %v30
    %44 = vst.msk [vmem:[#allocation2 + $0x6a] sm:$0xff] %vm34, %v31
    %45 = vst.msk [vmem:[#allocation2 + $0x7a] sm:$0xff] %vm34, %v32
    %46 = vst.msk [vmem:[#allocation2 + $0x82] sm:$0xff] %vm34, %v33
    %vm47 = vcmask 124930
    %48 = vst.msk [vmem:[#allocation2 - $0x2] sm:$0x4] %vm47, %v22
    %49 = vst.msk [vmem:[#allocation2 + $0x16] sm:$0x4] %vm47, %v24
    %50 = vst.msk [vmem:[#allocation2 + $0x2e] sm:$0x4] %vm47, %v26
    %51 = vst.msk [vmem:[#allocation2 + $0x46] sm:$0x4] %vm47, %v28
    %52 = vst.msk [vmem:[#allocation2 + $0x5e] sm:$0x4] %vm47, %v30
    %53 = vst.msk [vmem:[#allocation2 + $0x76] sm:$0x4] %vm47, %v32
    %vm54 = vcmask 123905
    %55 = vst.msk [vmem:[#allocation2] sm:$0x2] %vm54, %v22
    %56 = vst.msk [vmem:[#allocation2 + $0x18] sm:$0x2] %vm54, %v24
    %57 = vst.msk [vmem:[#allocation2 + $0x30] sm:$0x2] %vm54, %v26
    %58 = vst.msk [vmem:[#allocation2 + $0x48] sm:$0x2] %vm54, %v28
    %59 = vst.msk [vmem:[#allocation2 + $0x60] sm:$0x2] %vm54, %v30
    %60 = vst.msk [vmem:[#allocation2 + $0x78] sm:$0x2] %vm54, %v32
    %vm61 = vcmask 129030
    %62 = vst.msk [vmem:[#allocation2 + $0xc] sm:$0x40] %vm61, %v23
    %63 = vst.msk [vmem:[#allocation2 + $0x24] sm:$0x40] %vm61, %v25
    %64 = vst.msk [vmem:[#allocation2 + $0x3c] sm:$0x40] %vm61, %v27
    %65 = vst.msk [vmem:[#allocation2 + $0x54] sm:$0x40] %vm61, %v29
    %66 = vst.msk [vmem:[#allocation2 + $0x6c] sm:$0x40] %vm61, %v31
    %67 = vst.msk [vmem:[#allocation2 + $0x84] sm:$0x40] %vm61, %v33
    %vm68 = vcmask 128005
    %69 = vst.msk [vmem:[#allocation2 + $0xe] sm:$0x20] %vm68, %v23
    %70 = vst.msk [vmem:[#allocation2 + $0x26] sm:$0x20] %vm68, %v25
    %71 = vst.msk [vmem:[#allocation2 + $0x3e] sm:$0x20] %vm68, %v27
    %72 = vst.msk [vmem:[#allocation2 + $0x56] sm:$0x20] %vm68, %v29
    %73 = vst.msk [vmem:[#allocation2 + $0x6e] sm:$0x20] %vm68, %v31
    %74 = vst.msk [vmem:[#allocation2 + $0x86] sm:$0x20] %vm68, %v33
    %v75 = vld [vmem:[#allocation2] sm:$0xff]
    %v76 = vld [vmem:[#allocation2 + $0x8] sm:$0xff]
    %v77 = vld [vmem:[#allocation2 + $0x18] sm:$0xff]
    %v78 = vld [vmem:[#allocation2 + $0x20] sm:$0xff]
    %v79 = vld [vmem:[#allocation2 + $0x30] sm:$0xff]
    %v80 = vld [vmem:[#allocation2 + $0x38] sm:$0xff]
    %v81 = vld [vmem:[#allocation2 + $0x48] sm:$0xff]
    %v82 = vld [vmem:[#allocation2 + $0x50] sm:$0xff]
    %v83 = vld [vmem:[#allocation2 + $0x60] sm:$0xff]
    %v84 = vld [vmem:[#allocation2 + $0x68] sm:$0xff]
    %v85 = vld [vmem:[#allocation2 + $0x78] sm:$0xff]
    %v86 = vld [vmem:[#allocation2 + $0x80] sm:$0xff]
    %v87 = vld [vmem:[#allocation2 + $0x4] sm:$0xff]
    %v88 = vld [vmem:[#allocation2 + $0xc] sm:$0xff]
    %v89 = vld [vmem:[#allocation2 + $0x1c] sm:$0xff]
    %v90 = vld [vmem:[#allocation2 + $0x24] sm:$0xff]
    %v91 = vld [vmem:[#allocation2 + $0x34] sm:$0xff]
    %v92 = vld [vmem:[#allocation2 + $0x3c] sm:$0xff]
    %v93 = vld [vmem:[#allocation2 + $0x4c] sm:$0xff]
    %v94 = vld [vmem:[#allocation2 + $0x54] sm:$0xff]
    %v95 = vld [vmem:[#allocation2 + $0x64] sm:$0xff]
    %v96 = vld [vmem:[#allocation2 + $0x6c] sm:$0xff]
    %v97 = vld [vmem:[#allocation2 + $0x7c] sm:$0xff]
    %v98 = vld [vmem:[#allocation2 + $0x84] sm:$0xff]
    %v99 = vadd.f32 %v75, %v87
    %v100 = vadd.f32 %v76, %v88
    %v101 = vadd.f32 %v77, %v89
    %v102 = vadd.f32 %v78, %v90
    %v103 = vadd.f32 %v79, %v91
    %v104 = vadd.f32 %v80, %v92
    %v105 = vadd.f32 %v81, %v93
    %v106 = vadd.f32 %v82, %v94
    %v107 = vadd.f32 %v83, %v95
    %v108 = vadd.f32 %v84, %v96
    %v109 = vadd.f32 %v85, %v97
    %v110 = vadd.f32 %v86, %v98
    %v111 = vld [vmem:[#allocation2 + $0x1] sm:$0xff]
    %v112 = vld [vmem:[#allocation2 + $0x9] sm:$0xff]
    %v113 = vld [vmem:[#allocation2 + $0x19] sm:$0xff]
    %v114 = vld [vmem:[#allocation2 + $0x21] sm:$0xff]
    %v115 = vld [vmem:[#allocation2 + $0x31] sm:$0xff]
    %v116 = vld [vmem:[#allocation2 + $0x39] sm:$0xff]
    %v117 = vld [vmem:[#allocation2 + $0x49] sm:$0xff]
    %v118 = vld [vmem:[#allocation2 + $0x51] sm:$0xff]
    %v119 = vld [vmem:[#allocation2 + $0x61] sm:$0xff]
    %v120 = vld [vmem:[#allocation2 + $0x69] sm:$0xff]
    %v121 = vld [vmem:[#allocation2 + $0x79] sm:$0xff]
    %v122 = vld [vmem:[#allocation2 + $0x81] sm:$0xff]
    %v123 = vld [vmem:[#allocation2 + $0x3] sm:$0xff]
    %v124 = vld [vmem:[#allocation2 + $0xb] sm:$0xff]
    %v125 = vld [vmem:[#allocation2 + $0x1b] sm:$0xff]
    %v126 = vld [vmem:[#allocation2 + $0x23] sm:$0xff]
    %v127 = vld [vmem:[#allocation2 + $0x33] sm:$0xff]
    %v128 = vld [vmem:[#allocation2 + $0x3b] sm:$0xff]
    %v129 = vld [vmem:[#allocation2 + $0x4b] sm:$0xff]
    %v130 = vld [vmem:[#allocation2 + $0x53] sm:$0xff]
    %v131 = vld [vmem:[#allocation2 + $0x63] sm:$0xff]
    %v132 = vld [vmem:[#allocation2 + $0x6b] sm:$0xff]
    %v133 = vld [vmem:[#allocation2 + $0x7b] sm:$0xff]
    %v134 = vld [vmem:[#allocation2 + $0x83] sm:$0xff]
    %v135 = vadd.f32 %v111, %v123
    %v136 = vadd.f32 %v112, %v124
    %v137 = vadd.f32 %v113, %v125
    %v138 = vadd.f32 %v114, %v126
    %v139 = vadd.f32 %v115, %v127
    %v140 = vadd.f32 %v116, %v128
    %v141 = vadd.f32 %v117, %v129
    %v142 = vadd.f32 %v118, %v130
    %v143 = vadd.f32 %v119, %v131
    %v144 = vadd.f32 %v120, %v132
    %v145 = vadd.f32 %v121, %v133
    %v146 = vadd.f32 %v122, %v134
    %v147 = vmul.f32 %v135, 4.0
    %v148 = vmul.f32 %v136, 4.0
    %v149 = vmul.f32 %v137, 4.0
    %v150 = vmul.f32 %v138, 4.0
    %v151 = vmul.f32 %v139, 4.0
    %v152 = vmul.f32 %v140, 4.0
    %v153 = vmul.f32 %v141, 4.0
    %v154 = vmul.f32 %v142, 4.0
    %v155 = vmul.f32 %v143, 4.0
    %v156 = vmul.f32 %v144, 4.0
    %v157 = vmul.f32 %v145, 4.0
    %v158 = vmul.f32 %v146, 4.0
    %v159 = vadd.f32 %v99, %v147
    %v160 = vadd.f32 %v100, %v148
    %v161 = vadd.f32 %v101, %v149
    %v162 = vadd.f32 %v102, %v150
    %v163 = vadd.f32 %v103, %v151
    %v164 = vadd.f32 %v104, %v152
    %v165 = vadd.f32 %v105, %v153
    %v166 = vadd.f32 %v106, %v154
    %v167 = vadd.f32 %v107, %v155
    %v168 = vadd.f32 %v108, %v156
    %v169 = vadd.f32 %v109, %v157
    %v170 = vadd.f32 %v110, %v158
    %v171 = vld [vmem:[#allocation2 + $0x2] sm:$0xff]
    %v172 = vld [vmem:[#allocation2 + $0xa] sm:$0xff]
    %v173 = vld [vmem:[#allocation2 + $0x1a] sm:$0xff]
    %v174 = vld [vmem:[#allocation2 + $0x22] sm:$0xff]
    %v175 = vld [vmem:[#allocation2 + $0x32] sm:$0xff]
    %v176 = vld [vmem:[#allocation2 + $0x3a] sm:$0xff]
    %v177 = vld [vmem:[#allocation2 + $0x4a] sm:$0xff]
    %v178 = vld [vmem:[#allocation2 + $0x52] sm:$0xff]
    %v179 = vld [vmem:[#allocation2 + $0x62] sm:$0xff]
    %v180 = vld [vmem:[#allocation2 + $0x6a] sm:$0xff]
    %v181 = vld [vmem:[#allocation2 + $0x7a] sm:$0xff]
    %v182 = vld [vmem:[#allocation2 + $0x82] sm:$0xff]
    %v183 = vmul.f32 %v171, 6.0
    %v184 = vmul.f32 %v172, 6.0
    %v185 = vmul.f32 %v173, 6.0
    %v186 = vmul.f32 %v174, 6.0
    %v187 = vmul.f32 %v175, 6.0
    %v188 = vmul.f32 %v176, 6.0
    %v189 = vmul.f32 %v177, 6.0
    %v190 = vmul.f32 %v178, 6.0
    %v191 = vmul.f32 %v179, 6.0
    %v192 = vmul.f32 %v180, 6.0
    %v193 = vmul.f32 %v181, 6.0
    %v194 = vmul.f32 %v182, 6.0
    %v195 = vadd.f32 %v159, %v183
    %v196 = vadd.f32 %v160, %v184
    %v197 = vadd.f32 %v161, %v185
    %v198 = vadd.f32 %v162, %v186
    %v199 = vadd.f32 %v163, %v187
    %v200 = vadd.f32 %v164, %v188
    %v201 = vadd.f32 %v165, %v189
    %v202 = vadd.f32 %v166, %v190
    %v203 = vadd.f32 %v167, %v191
    %v204 = vadd.f32 %v168, %v192
    %v205 = vadd.f32 %v169, %v193
    %v206 = vadd.f32 %v170, %v194
    %219 = vrot.lane.b32.xlu0 %v195, 2
    %v220 = vpop.permute.xlu0 %219
    %221 = vrot.lane.b32.xlu0 %v196, 2
    %v222 = vpop.permute.xlu0 %221
    %223 = vrot.lane.b32.xlu0 %v197, 2
    %v224 = vpop.permute.xlu0 %223
    %225 = vrot.lane.b32.xlu0 %v198, 2
    %v226 = vpop.permute.xlu0 %225
    %227 = vrot.lane.b32.xlu0 %v199, 2
    %v228 = vpop.permute.xlu0 %227
    %229 = vrot.lane.b32.xlu0 %v200, 2
    %v230 = vpop.permute.xlu0 %229
    %231 = vrot.lane.b32.xlu0 %v201, 2
    %v232 = vpop.permute.xlu0 %231
    %233 = vrot.lane.b32.xlu0 %v202, 2
    %v234 = vpop.permute.xlu0 %233
    %235 = vrot.lane.b32.xlu0 %v203, 2
    %v236 = vpop.permute.xlu0 %235
    %237 = vrot.lane.b32.xlu0 %v204, 2
    %v238 = vpop.permute.xlu0 %237
    %239 = vrot.lane.b32.xlu0 %v205, 2
    %v240 = vpop.permute.xlu0 %239
    %241 = vrot.lane.b32.xlu0 %v206, 2
    %v242 = vpop.permute.xlu0 %241
    %vm255 = vcmask 146448
    %256 = vst.msk [vmem:[#allocation3] sm:$0xff] %vm255, %v220
    %257 = vst.msk [vmem:[#allocation3 + $0x8] sm:$0xff] %vm255, %v222
    %258 = vst.msk [vmem:[#allocation3 + $0x10] sm:$0xff] %vm255, %v224
    %259 = vst.msk [vmem:[#allocation3 + $0x18] sm:$0xff] %vm255, %v226
    %260 = vst.msk [vmem:[#allocation3 + $0x20] sm:$0xff] %vm255, %v228
    %261 = vst.msk [vmem:[#allocation3 + $0x28] sm:$0xff] %vm255, %v230
    %262 = vst.msk [vmem:[#allocation3 + $0x30] sm:$0xff] %vm255, %v232
    %263 = vst.msk [vmem:[#allocation3 + $0x38] sm:$0xff] %vm255, %v234
    %264 = vst.msk [vmem:[#allocation3 + $0x40] sm:$0xff] %vm255, %v236
    %265 = vst.msk [vmem:[#allocation3 + $0x48] sm:$0xff] %vm255, %v238
    %266 = vst.msk [vmem:[#allocation3 + $0x50] sm:$0xff] %vm255, %v240
    %267 = vst.msk [vmem:[#allocation3 + $0x58] sm:$0xff] %vm255, %v242
    %268 = vrot.lane.b32.xlu0 %v195, 126
    %v269 = vpop.permute.xlu0 %268
    %270 = vrot.lane.b32.xlu0 %v196, 126
    %v271 = vpop.permute.xlu0 %270
    %272 = vrot.lane.b32.xlu0 %v197, 126
    %v273 = vpop.permute.xlu0 %272
    %274 = vrot.lane.b32.xlu0 %v198, 126
    %v275 = vpop.permute.xlu0 %274
    %276 = vrot.lane.b32.xlu0 %v199, 126
    %v277 = vpop.permute.xlu0 %276
    %278 = vrot.lane.b32.xlu0 %v200, 126
    %v279 = vpop.permute.xlu0 %278
    %280 = vrot.lane.b32.xlu0 %v201, 126
    %v281 = vpop.permute.xlu0 %280
    %282 = vrot.lane.b32.xlu0 %v202, 126
    %v283 = vpop.permute.xlu0 %282
    %284 = vrot.lane.b32.xlu0 %v203, 126
    %v285 = vpop.permute.xlu0 %284
    %286 = vrot.lane.b32.xlu0 %v204, 126
    %v287 = vpop.permute.xlu0 %286
    %288 = vrot.lane.b32.xlu0 %v205, 126
    %v289 = vpop.permute.xlu0 %288
    %290 = vrot.lane.b32.xlu0 %v206, 126
    %v291 = vpop.permute.xlu0 %290
    %vm304 = vcmask 7168
    %305 = vst.msk [vmem:[#allocation3] sm:$0xff] %vm304, %v269
    %306 = vst.msk [vmem:[#allocation3 + $0x8] sm:$0xff] %vm304, %v271
    %307 = vst.msk [vmem:[#allocation3 + $0x10] sm:$0xff] %vm304, %v273
    %308 = vst.msk [vmem:[#allocation3 + $0x18] sm:$0xff] %vm304, %v275
    %309 = vst.msk [vmem:[#allocation3 + $0x20] sm:$0xff] %vm304, %v277
    %310 = vst.msk [vmem:[#allocation3 + $0x28] sm:$0xff] %vm304, %v279
    %311 = vst.msk [vmem:[#allocation3 + $0x30] sm:$0xff] %vm304, %v281
    %312 = vst.msk [vmem:[#allocation3 + $0x38] sm:$0xff] %vm304, %v283
    %313 = vst.msk [vmem:[#allocation3 + $0x40] sm:$0xff] %vm304, %v285
    %314 = vst.msk [vmem:[#allocation3 + $0x48] sm:$0xff] %vm304, %v287
    %315 = vst.msk [vmem:[#allocation3 + $0x50] sm:$0xff] %vm304, %v289
    %316 = vst.msk [vmem:[#allocation3 + $0x58] sm:$0xff] %vm304, %v291
    %vm317 = vcmask 15368
    %318 = vst.msk [vmem:[#allocation3] sm:$0xff] %vm317, %v195
    %319 = vst.msk [vmem:[#allocation3 + $0x8] sm:$0xff] %vm317, %v196
    %320 = vst.msk [vmem:[#allocation3 + $0x10] sm:$0xff] %vm317, %v197
    %321 = vst.msk [vmem:[#allocation3 + $0x18] sm:$0xff] %vm317, %v198
    %322 = vst.msk [vmem:[#allocation3 + $0x20] sm:$0xff] %vm317, %v199
    %323 = vst.msk [vmem:[#allocation3 + $0x28] sm:$0xff] %vm317, %v200
    %324 = vst.msk [vmem:[#allocation3 + $0x30] sm:$0xff] %vm317, %v201
    %325 = vst.msk [vmem:[#allocation3 + $0x38] sm:$0xff] %vm317, %v202
    %326 = vst.msk [vmem:[#allocation3 + $0x40] sm:$0xff] %vm317, %v203
    %327 = vst.msk [vmem:[#allocation3 + $0x48] sm:$0xff] %vm317, %v204
    %328 = vst.msk [vmem:[#allocation3 + $0x50] sm:$0xff] %vm317, %v205
    %329 = vst.msk [vmem:[#allocation3 + $0x58] sm:$0xff] %vm317, %v206
    %330 = vrot.lane.b32.xlu0 %v195, 4
    %v331 = vpop.permute.xlu0 %330
    %332 = vrot.lane.b32.xlu0 %v196, 4
    %v333 = vpop.permute.xlu0 %332
    %334 = vrot.lane.b32.xlu0 %v197, 4
    %v335 = vpop.permute.xlu0 %334
    %336 = vrot.lane.b32.xlu0 %v198, 4
    %v337 = vpop.permute.xlu0 %336
    %338 = vrot.lane.b32.xlu0 %v199, 4
    %v339 = vpop.permute.xlu0 %338
    %340 = vrot.lane.b32.xlu0 %v200, 4
    %v341 = vpop.permute.xlu0 %340
    %342 = vrot.lane.b32.xlu0 %v201, 4
    %v343 = vpop.permute.xlu0 %342
    %344 = vrot.lane.b32.xlu0 %v202, 4
    %v345 = vpop.permute.xlu0 %344
    %346 = vrot.lane.b32.xlu0 %v203, 4
    %v347 = vpop.permute.xlu0 %346
    %348 = vrot.lane.b32.xlu0 %v204, 4
    %v349 = vpop.permute.xlu0 %348
    %350 = vrot.lane.b32.xlu0 %v205, 4
    %v351 = vpop.permute.xlu0 %350
    %352 = vrot.lane.b32.xlu0 %v206, 4
    %v353 = vpop.permute.xlu0 %352
    %vm366 = vcmask 154768
    %367 = vst.msk [vmem:[#allocation3] sm:$0xff] %vm366, %v331
    %368 = vst.msk [vmem:[#allocation3 + $0x8] sm:$0xff] %vm366, %v333
    %369 = vst.msk [vmem:[#allocation3 + $0x10] sm:$0xff] %vm366, %v335
    %370 = vst.msk [vmem:[#allocation3 + $0x18] sm:$0xff] %vm366, %v337
    %371 = vst.msk [vmem:[#allocation3 + $0x20] sm:$0xff] %vm366, %v339
    %372 = vst.msk [vmem:[#allocation3 + $0x28] sm:$0xff] %vm366, %v341
    %373 = vst.msk [vmem:[#allocation3 + $0x30] sm:$0xff] %vm366, %v343
    %374 = vst.msk [vmem:[#allocation3 + $0x38] sm:$0xff] %vm366, %v345
    %375 = vst.msk [vmem:[#allocation3 + $0x40] sm:$0xff] %vm366, %v347
    %376 = vst.msk [vmem:[#allocation3 + $0x48] sm:$0xff] %vm366, %v349
    %377 = vst.msk [vmem:[#allocation3 + $0x50] sm:$0xff] %vm366, %v351
    %378 = vst.msk [vmem:[#allocation3 + $0x58] sm:$0xff] %vm366, %v353
    %379 = vrot.lane.b32.xlu0 %v195, 6
    %v380 = vpop.permute.xlu0 %379
    %381 = vrot.lane.b32.xlu0 %v196, 6
    %v382 = vpop.permute.xlu0 %381
    %383 = vrot.lane.b32.xlu0 %v197, 6
    %v384 = vpop.permute.xlu0 %383
    %385 = vrot.lane.b32.xlu0 %v198, 6
    %v386 = vpop.permute.xlu0 %385
    %387 = vrot.lane.b32.xlu0 %v199, 6
    %v388 = vpop.permute.xlu0 %387
    %389 = vrot.lane.b32.xlu0 %v200, 6
    %v390 = vpop.permute.xlu0 %389
    %391 = vrot.lane.b32.xlu0 %v201, 6
    %v392 = vpop.permute.xlu0 %391
    %393 = vrot.lane.b32.xlu0 %v202, 6
    %v394 = vpop.permute.xlu0 %393
    %395 = vrot.lane.b32.xlu0 %v203, 6
    %v396 = vpop.permute.xlu0 %395
    %397 = vrot.lane.b32.xlu0 %v204, 6
    %v398 = vpop.permute.xlu0 %397
    %399 = vrot.lane.b32.xlu0 %v205, 6
    %v400 = vpop.permute.xlu0 %399
    %401 = vrot.lane.b32.xlu0 %v206, 6
    %v402 = vpop.permute.xlu0 %401
    %vm415 = vcmask 162968
    %416 = vst.msk [vmem:[#allocation3] sm:$0xff] %vm415, %v380
    %417 = vst.msk [vmem:[#allocation3 + $0x8] sm:$0xff] %vm415, %v382
    %418 = vst.msk [vmem:[#allocation3 + $0x10] sm:$0xff] %vm415, %v384
    %419 = vst.msk [vmem:[#allocation3 + $0x18] sm:$0xff] %vm415, %v386
    %420 = vst.msk [vmem:[#allocation3 + $0x20] sm:$0xff] %vm415, %v388
    %421 = vst.msk [vmem:[#allocation3 + $0x28] sm:$0xff] %vm415, %v390
    %422 = vst.msk [vmem:[#allocation3 + $0x30] sm:$0xff] %vm415, %v392
    %423 = vst.msk [vmem:[#allocation3 + $0x38] sm:$0xff] %vm415, %v394
    %424 = vst.msk [vmem:[#allocation3 + $0x40] sm:$0xff] %vm415, %v396
    %425 = vst.msk [vmem:[#allocation3 + $0x48] sm:$0xff] %vm415, %v398
    %426 = vst.msk [vmem:[#allocation3 + $0x50] sm:$0xff] %vm415, %v400
    %427 = vst.msk [vmem:[#allocation3 + $0x58] sm:$0xff] %vm415, %v402
    %v428 = vld [vmem:[#allocation3] sm:$0xff]
    %v429 = vld [vmem:[#allocation3 + $0x8] sm:$0xff]
    %v430 = vld [vmem:[#allocation3 + $0x10] sm:$0xff]
    %v431 = vld [vmem:[#allocation3 + $0x18] sm:$0xff]
    %v432 = vld [vmem:[#allocation3 + $0x20] sm:$0xff]
    %v433 = vld [vmem:[#allocation3 + $0x28] sm:$0xff]
    %v434 = vld [vmem:[#allocation3 + $0x30] sm:$0xff]
    %v435 = vld [vmem:[#allocation3 + $0x38] sm:$0xff]
    %v436 = vld [vmem:[#allocation3 + $0x40] sm:$0xff]
    %v437 = vld [vmem:[#allocation3 + $0x48] sm:$0xff]
    %v438 = vld [vmem:[#allocation3 + $0x50] sm:$0xff]
    %v439 = vld [vmem:[#allocation3 + $0x58] sm:$0xff]
    %452 = vrot.lane.b32.xlu0 %v428, 124
    %v453 = vpop.permute.xlu0 %452
    %454 = vrot.lane.b32.xlu0 %v429, 124
    %v455 = vpop.permute.xlu0 %454
    %456 = vrot.lane.b32.xlu0 %v430, 124
    %v457 = vpop.permute.xlu0 %456
    %458 = vrot.lane.b32.xlu0 %v431, 124
    %v459 = vpop.permute.xlu0 %458
    %460 = vrot.lane.b32.xlu0 %v432, 124
    %v461 = vpop.permute.xlu0 %460
    %462 = vrot.lane.b32.xlu0 %v433, 124
    %v463 = vpop.permute.xlu0 %462
    %464 = vrot.lane.b32.xlu0 %v434, 124
    %v465 = vpop.permute.xlu0 %464
    %466 = vrot.lane.b32.xlu0 %v435, 124
    %v467 = vpop.permute.xlu0 %466
    %468 = vrot.lane.b32.xlu0 %v436, 124
    %v469 = vpop.permute.xlu0 %468
    %470 = vrot.lane.b32.xlu0 %v437, 124
    %v471 = vpop.permute.xlu0 %470
    %472 = vrot.lane.b32.xlu0 %v438, 124
    %v473 = vpop.permute.xlu0 %472
    %474 = vrot.lane.b32.xlu0 %v439, 124
    %v475 = vpop.permute.xlu0 %474
    %v488 = vadd.f32 %v428, %v453
    %v489 = vadd.f32 %v429, %v455
    %v490 = vadd.f32 %v430, %v457
    %v491 = vadd.f32 %v431, %v459
    %v492 = vadd.f32 %v432, %v461
    %v493 = vadd.f32 %v433, %v463
    %v494 = vadd.f32 %v434, %v465
    %v495 = vadd.f32 %v435, %v467
    %v496 = vadd.f32 %v436, %v469
    %v497 = vadd.f32 %v437, %v471
    %v498 = vadd.f32 %v438, %v473
    %v499 = vadd.f32 %v439, %v475
    %500 = vrot.lane.b32.xlu0 %v428, 126
    %v501 = vpop.permute.xlu0 %500
    %502 = vrot.lane.b32.xlu0 %v429, 126
    %v503 = vpop.permute.xlu0 %502
    %504 = vrot.lane.b32.xlu0 %v430, 126
    %v505 = vpop.permute.xlu0 %504
    %506 = vrot.lane.b32.xlu0 %v431, 126
    %v507 = vpop.permute.xlu0 %506
    %508 = vrot.lane.b32.xlu0 %v432, 126
    %v509 = vpop.permute.xlu0 %508
    %510 = vrot.lane.b32.xlu0 %v433, 126
    %v511 = vpop.permute.xlu0 %510
    %512 = vrot.lane.b32.xlu0 %v434, 126
    %v513 = vpop.permute.xlu0 %512
    %514 = vrot.lane.b32.xlu0 %v435, 126
    %v515 = vpop.permute.xlu0 %514
    %516 = vrot.lane.b32.xlu0 %v436, 126
    %v517 = vpop.permute.xlu0 %516
    %518 = vrot.lane.b32.xlu0 %v437, 126
    %v519 = vpop.permute.xlu0 %518
    %520 = vrot.lane.b32.xlu0 %v438, 126
    %v521 = vpop.permute.xlu0 %520
    %522 = vrot.lane.b32.xlu0 %v439, 126
    %v523 = vpop.permute.xlu0 %522
    %v536 = vadd.f32 %v428, %v501
    %v537 = vadd.f32 %v429, %v503
    %v538 = vadd.f32 %v430, %v505
    %v539 = vadd.f32 %v431, %v507
    %v540 = vadd.f32 %v432, %v509
    %v541 = vadd.f32 %v433, %v511
    %v542 = vadd.f32 %v434, %v513
    %v543 = vadd.f32 %v435, %v515
    %v544 = vadd.f32 %v436, %v517
    %v545 = vadd.f32 %v437, %v519
    %v546 = vadd.f32 %v438, %v521
    %v547 = vadd.f32 %v439, %v523
    %v548 = vmul.f32 %v536, 4.0
    %v549 = vmul.f32 %v537, 4.0
    %v550 = vmul.f32 %v538, 4.0
    %v551 = vmul.f32 %v539, 4.0
    %v552 = vmul.f32 %v540, 4.0
    %v553 = vmul.f32 %v541, 4.0
    %v554 = vmul.f32 %v542, 4.0
    %v555 = vmul.f32 %v543, 4.0
    %v556 = vmul.f32 %v544, 4.0
    %v557 = vmul.f32 %v545, 4.0
    %v558 = vmul.f32 %v546, 4.0
    %v559 = vmul.f32 %v547, 4.0
    %572 = vrot.lane.b32.xlu0 %v548, 127
    %v573 = vpop.permute.xlu0 %572
    %574 = vrot.lane.b32.xlu0 %v549, 127
    %v575 = vpop.permute.xlu0 %574
    %576 = vrot.lane.b32.xlu0 %v550, 127
    %v577 = vpop.permute.xlu0 %576
    %578 = vrot.lane.b32.xlu0 %v551, 127
    %v579 = vpop.permute.xlu0 %578
    %580 = vrot.lane.b32.xlu0 %v552, 127
    %v581 = vpop.permute.xlu0 %580
    %582 = vrot.lane.b32.xlu0 %v553, 127
    %v583 = vpop.permute.xlu0 %582
    %584 = vrot.lane.b32.xlu0 %v554, 127
    %v585 = vpop.permute.xlu0 %584
    %586 = vrot.lane.b32.xlu0 %v555, 127
    %v587 = vpop.permute.xlu0 %586
    %588 = vrot.lane.b32.xlu0 %v556, 127
    %v589 = vpop.permute.xlu0 %588
    %590 = vrot.lane.b32.xlu0 %v557, 127
    %v591 = vpop.permute.xlu0 %590
    %592 = vrot.lane.b32.xlu0 %v558, 127
    %v593 = vpop.permute.xlu0 %592
    %594 = vrot.lane.b32.xlu0 %v559, 127
    %v595 = vpop.permute.xlu0 %594
    %v608 = vadd.f32 %v488, %v573
    %v609 = vadd.f32 %v489, %v575
    %v610 = vadd.f32 %v490, %v577
    %v611 = vadd.f32 %v491, %v579
    %v612 = vadd.f32 %v492, %v581
    %v613 = vadd.f32 %v493, %v583
    %v614 = vadd.f32 %v494, %v585
    %v615 = vadd.f32 %v495, %v587
    %v616 = vadd.f32 %v496, %v589
    %v617 = vadd.f32 %v497, %v591
    %v618 = vadd.f32 %v498, %v593
    %v619 = vadd.f32 %v499, %v595
    %v620 = vmul.f32 %v428, 6.0
    %v621 = vmul.f32 %v429, 6.0
    %v622 = vmul.f32 %v430, 6.0
    %v623 = vmul.f32 %v431, 6.0
    %v624 = vmul.f32 %v432, 6.0
    %v625 = vmul.f32 %v433, 6.0
    %v626 = vmul.f32 %v434, 6.0
    %v627 = vmul.f32 %v435, 6.0
    %v628 = vmul.f32 %v436, 6.0
    %v629 = vmul.f32 %v437, 6.0
    %v630 = vmul.f32 %v438, 6.0
    %v631 = vmul.f32 %v439, 6.0
    %644 = vrot.lane.b32.xlu0 %v620, 126
    %v645 = vpop.permute.xlu0 %644
    %646 = vrot.lane.b32.xlu0 %v621, 126
    %v647 = vpop.permute.xlu0 %646
    %648 = vrot.lane.b32.xlu0 %v622, 126
    %v649 = vpop.permute.xlu0 %648
    %650 = vrot.lane.b32.xlu0 %v623, 126
    %v651 = vpop.permute.xlu0 %650
    %652 = vrot.lane.b32.xlu0 %v624, 126
    %v653 = vpop.permute.xlu0 %652
    %654 = vrot.lane.b32.xlu0 %v625, 126
    %v655 = vpop.permute.xlu0 %654
    %656 = vrot.lane.b32.xlu0 %v626, 126
    %v657 = vpop.permute.xlu0 %656
    %658 = vrot.lane.b32.xlu0 %v627, 126
    %v659 = vpop.permute.xlu0 %658
    %660 = vrot.lane.b32.xlu0 %v628, 126
    %v661 = vpop.permute.xlu0 %660
    %662 = vrot.lane.b32.xlu0 %v629, 126
    %v663 = vpop.permute.xlu0 %662
    %664 = vrot.lane.b32.xlu0 %v630, 126
    %v665 = vpop.permute.xlu0 %664
    %666 = vrot.lane.b32.xlu0 %v631, 126
    %v667 = vpop.permute.xlu0 %666
    %v680 = vadd.f32 %v608, %v645
    %v681 = vadd.f32 %v609, %v647
    %v682 = vadd.f32 %v610, %v649
    %v683 = vadd.f32 %v611, %v651
    %v684 = vadd.f32 %v612, %v653
    %v685 = vadd.f32 %v613, %v655
    %v686 = vadd.f32 %v614, %v657
    %v687 = vadd.f32 %v615, %v659
    %v688 = vadd.f32 %v616, %v661
    %v689 = vadd.f32 %v617, %v663
    %v690 = vadd.f32 %v618, %v665
    %v691 = vadd.f32 %v619, %v667
    %v692 = vmul.f32 %v680, 0.00390625
    %v693 = vmul.f32 %v681, 0.00390625
    %v694 = vmul.f32 %v682, 0.00390625
    %v695 = vmul.f32 %v683, 0.00390625
    %v696 = vmul.f32 %v684, 0.00390625
    %v697 = vmul.f32 %v685, 0.00390625
    %v698 = vmul.f32 %v686, 0.00390625
    %v699 = vmul.f32 %v687, 0.00390625
    %v700 = vmul.f32 %v688, 0.00390625
    %v701 = vmul.f32 %v689, 0.00390625
    %v702 = vmul.f32 %v690, 0.00390625
    %v703 = vmul.f32 %v691, 0.00390625
    %704 = vst.msk [vmem:[%s1] sm:$0xff] %vm34, %v692
    %705 = vst.msk [vmem:[%s1 + $0x8] sm:$0xff] %vm34, %v693
    %706 = vst.msk [vmem:[%s1 + $0x10] sm:$0xff] %vm34, %v694
    %707 = vst.msk [vmem:[%s1 + $0x18] sm:$0xff] %vm34, %v695
    %708 = vst.msk [vmem:[%s1 + $0x20] sm:$0xff] %vm34, %v696
    %709 = vst.msk [vmem:[%s1 + $0x28] sm:$0xff] %vm34, %v697
    %710 = vst.msk [vmem:[%s1 + $0x30] sm:$0xff] %vm34, %v698
    %711 = vst.msk [vmem:[%s1 + $0x38] sm:$0xff] %vm34, %v699
    %712 = vst.msk [vmem:[%s1 + $0x40] sm:$0xff] %vm34, %v700
    %713 = vst.msk [vmem:[%s1 + $0x48] sm:$0xff] %vm34, %v701
    %714 = vst.msk [vmem:[%s1 + $0x50] sm:$0xff] %vm34, %v702
    %715 = vst.msk [vmem:[%s1 + $0x58] sm:$0xff] %vm34, %v703
    // Predicated region
    $region10: #{gauss_pyramid_conv.3} parent=1 // pred_check
      _
    $region11: #{gauss_pyramid_conv.3} parent=1 // pred_check_branch
      %717 = sbr.rel (0) target = $region13
    $region12: #{gauss_pyramid_conv.3} parent=1 // pred_region
      _
    $region13: #{gauss_pyramid_conv.3} parent=1 // pred_fallthru
      _
    // Predicated region
    $region14: #{gauss_pyramid_conv.3} parent=1 // pred_check
      _
    $region15: #{gauss_pyramid_conv.3} parent=1 // pred_check_branch
      %719 = sbr.rel (0) target = $region17
    $region16: #{gauss_pyramid_conv.3} parent=1 // pred_region
      _
    $region17: #{gauss_pyramid_conv.3} parent=1 // pred_fallthru
      _
    %720 = vsyncpa [#allocation5], 1

// kernel: gauss_pyramid_conv.5
$region0: #{gauss_pyramid_conv.5}
  #allocation0 [shape = 'u32[]', space=smem, size = 0x4, offset = 0x4, fixed_abs, tag = 'smem constant byte address 0x4 - core index']
  #allocation1 [shape = 'u32[144,128]{1,0:T(1,128)}', space=vmem, size = 0x12000, scoped, tag = 'internal scratch']
  #allocation2 [shape = 'f32[6,8,4]{2,1,0:T(8,128)}', space=vmem, size = 0x6000, scoped, tag = 'scratch operand']
  #allocation3 [shape = 'f32[6,4,8]{2,1,0:T(4,128)}', space=vmem, size = 0x3000, scoped, tag = 'scratch operand']
  %s0 = inlined_call_operand.vmem [shape: f32[6,4,4], index: 0, kind: input, shape index: {}]
  %s1 = inlined_call_operand.vmem [shape: f32[6,4,4], index: 1, kind: output, shape index: {}]
  %s2 = sld [smem:[#allocation0]]
  $region14: #{gauss_pyramid_conv.5} parent=0
    _
  %s4 = ssub.s32 1, %s2
  %s5 = scalar_select 0, %s4, %s2
  // Predicated region
  $region2: #{gauss_pyramid_conv.5} parent=0 // pred_check
    _
  $region3: #{gauss_pyramid_conv.5} parent=0 // pred_check_branch
    %7 = sbr.rel (0) target = $region5
  $region4: #{gauss_pyramid_conv.5} parent=0 // pred_region
    _
  $region5: #{gauss_pyramid_conv.5} parent=0 // pred_fallthru
    _
  %v8 = vld [vmem:[%s0] sm:$0xf]
  %v9 = vld [vmem:[%s0 + $0x4] sm:$0xf]
  %v10 = vld [vmem:[%s0 + $0x8] sm:$0xf]
  %v11 = vld [vmem:[%s0 + $0xc] sm:$0xf]
  %v12 = vld [vmem:[%s0 + $0x10] sm:$0xf]
  %v13 = vld [vmem:[%s0 + $0x14] sm:$0xf]
  %vm14 = vcmask 27648
  %15 = vst.msk [vmem:[#allocation2 + $0x2] sm:$0xf] %vm14, %v8
  %16 = vst.msk [vmem:[#allocation2 + $0xa] sm:$0xf] %vm14, %v9
  %17 = vst.msk [vmem:[#allocation2 + $0x12] sm:$0xf] %vm14, %v10
  %18 = vst.msk [vmem:[#allocation2 + $0x1a] sm:$0xf] %vm14, %v11
  %19 = vst.msk [vmem:[#allocation2 + $0x22] sm:$0xf] %vm14, %v12
  %20 = vst.msk [vmem:[#allocation2 + $0x2a] sm:$0xf] %vm14, %v13
  %vm21 = vcmask 26626
  %22 = vst.msk [vmem:[#allocation2 - $0x2] sm:$0x4] %vm21, %v8
  %23 = vst.msk [vmem:[#allocation2 + $0x6] sm:$0x4] %vm21, %v9
  %24 = vst.msk [vmem:[#allocation2 + $0xe] sm:$0x4] %vm21, %v10
  %25 = vst.msk [vmem:[#allocation2 + $0x16] sm:$0x4] %vm21, %v11
  %26 = vst.msk [vmem:[#allocation2 + $0x1e] sm:$0x4] %vm21, %v12
  %27 = vst.msk [vmem:[#allocation2 + $0x26] sm:$0x4] %vm21, %v13
  %vm28 = vcmask 25601
  %29 = vst.msk [vmem:[#allocation2] sm:$0x2] %vm28, %v8
  %30 = vst.msk [vmem:[#allocation2 + $0x8] sm:$0x2] %vm28, %v9
  %31 = vst.msk [vmem:[#allocation2 + $0x10] sm:$0x2] %vm28, %v10
  %32 = vst.msk [vmem:[#allocation2 + $0x18] sm:$0x2] %vm28, %v11
  %33 = vst.msk [vmem:[#allocation2 + $0x20] sm:$0x2] %vm28, %v12
  %34 = vst.msk [vmem:[#allocation2 + $0x28] sm:$0x2] %vm28, %v13
  %35 = vst.msk [vmem:[#allocation2 + $0x4] sm:$0x4] %vm21, %v8
  %36 = vst.msk [vmem:[#allocation2 + $0xc] sm:$0x4] %vm21, %v9
  %37 = vst.msk [vmem:[#allocation2 + $0x14] sm:$0x4] %vm21, %v10
  %38 = vst.msk [vmem:[#allocation2 + $0x1c] sm:$0x4] %vm21, %v11
  %39 = vst.msk [vmem:[#allocation2 + $0x24] sm:$0x4] %vm21, %v12
  %40 = vst.msk [vmem:[#allocation2 + $0x2c] sm:$0x4] %vm21, %v13
  %41 = vst.msk [vmem:[#allocation2 + $0x6] sm:$0x2] %vm28, %v8
  %42 = vst.msk [vmem:[#allocation2 + $0xe] sm:$0x2] %vm28, %v9
  %43 = vst.msk [vmem:[#allocation2 + $0x16] sm:$0x2] %vm28, %v10
  %44 = vst.msk [vmem:[#allocation2 + $0x1e] sm:$0x2] %vm28, %v11
  %45 = vst.msk [vmem:[#allocation2 + $0x26] sm:$0x2] %vm28, %v12
  %46 = vst.msk [vmem:[#allocation2 + $0x2e] sm:$0x2] %vm28, %v13
  %v47 = vld [vmem:[#allocation2] sm:$0xf]
  %v48 = vld [vmem:[#allocation2 + $0x8] sm:$0xf]
  %v49 = vld [vmem:[#allocation2 + $0x10] sm:$0xf]
  %v50 = vld [vmem:[#allocation2 + $0x18] sm:$0xf]
  %v51 = vld [vmem:[#allocation2 + $0x20] sm:$0xf]
  %v52 = vld [vmem:[#allocation2 + $0x28] sm:$0xf]
  %v53 = vld [vmem:[#allocation2 + $0x4] sm:$0xf]
  %v54 = vld [vmem:[#allocation2 + $0xc] sm:$0xf]
  %v55 = vld [vmem:[#allocation2 + $0x14] sm:$0xf]
  %v56 = vld [vmem:[#allocation2 + $0x1c] sm:$0xf]
  %v57 = vld [vmem:[#allocation2 + $0x24] sm:$0xf]
  %v58 = vld [vmem:[#allocation2 + $0x2c] sm:$0xf]
  %v59 = vadd.f32 %v47, %v53
  %v60 = vadd.f32 %v48, %v54
  %v61 = vadd.f32 %v49, %v55
  %v62 = vadd.f32 %v50, %v56
  %v63 = vadd.f32 %v51, %v57
  %v64 = vadd.f32 %v52, %v58
  %v65 = vld [vmem:[#allocation2 + $0x1] sm:$0xf]
  %v66 = vld [vmem:[#allocation2 + $0x9] sm:$0xf]
  %v67 = vld [vmem:[#allocation2 + $0x11] sm:$0xf]
  %v68 = vld [vmem:[#allocation2 + $0x19] sm:$0xf]
  %v69 = vld [vmem:[#allocation2 + $0x21] sm:$0xf]
  %v70 = vld [vmem:[#allocation2 + $0x29] sm:$0xf]
  %v71 = vld [vmem:[#allocation2 + $0x3] sm:$0xf]
  %v72 = vld [vmem:[#allocation2 + $0xb] sm:$0xf]
  %v73 = vld [vmem:[#allocation2 + $0x13] sm:$0xf]
  %v74 = vld [vmem:[#allocation2 + $0x1b] sm:$0xf]
  %v75 = vld [vmem:[#allocation2 + $0x23] sm:$0xf]
  %v76 = vld [vmem:[#allocation2 + $0x2b] sm:$0xf]
  %v77 = vadd.f32 %v65, %v71
  %v78 = vadd.f32 %v66, %v72
  %v79 = vadd.f32 %v67, %v73
  %v80 = vadd.f32 %v68, %v74
  %v81 = vadd.f32 %v69, %v75
  %v82 = vadd.f32 %v70, %v76
  %v83 = vmul.f32 %v77, 4.0
  %v84 = vmul.f32 %v78, 4.0
  %v85 = vmul.f32 %v79, 4.0
  %v86 = vmul.f32 %v80, 4.0
  %v87 = vmul.f32 %v81, 4.0
  %v88 = vmul.f32 %v82, 4.0
  %v89 = vadd.f32 %v59, %v83
  %v90 = vadd.f32 %v60, %v84
  %v91 = vadd.f32 %v61, %v85
  %v92 = vadd.f32 %v62, %v86
  %v93 = vadd.f32 %v63, %v87
  %v94 = vadd.f32 %v64, %v88
  %v95 = vld [vmem:[#allocation2 + $0x2] sm:$0xf]
  %v96 = vld [vmem:[#allocation2 + $0xa] sm:$0xf]
  %v97 = vld [vmem:[#allocation2 + $0x12] sm:$0xf]
  %v98 = vld [vmem:[#allocation2 + $0x1a] sm:$0xf]
  %v99 = vld [vmem:[#allocation2 + $0x22] sm:$0xf]
  %v100 = vld [vmem:[#allocation2 + $0x2a] sm:$0xf]
  %v101 = vmul.f32 %v95, 6.0
  %v102 = vmul.f32 %v96, 6.0
  %v103 = vmul.f32 %v97, 6.0
  %v104 = vmul.f32 %v98, 6.0
  %v105 = vmul.f32 %v99, 6.0
  %v106 = vmul.f32 %v100, 6.0
  %v107 = vadd.f32 %v89, %v101
  %v108 = vadd.f32 %v90, %v102
  %v109 = vadd.f32 %v91, %v103
  %v110 = vadd.f32 %v92, %v104
  %v111 = vadd.f32 %v93, %v105
  %v112 = vadd.f32 %v94, %v106
  %119 = vrot.lane.b32.xlu0 %v107, 2
  %v120 = vpop.permute.xlu0 %119
  %121 = vrot.lane.b32.xlu0 %v108, 2
  %v122 = vpop.permute.xlu0 %121
  %123 = vrot.lane.b32.xlu0 %v109, 2
  %v124 = vpop.permute.xlu0 %123
  %125 = vrot.lane.b32.xlu0 %v110, 2
  %v126 = vpop.permute.xlu0 %125
  %127 = vrot.lane.b32.xlu0 %v111, 2
  %v128 = vpop.permute.xlu0 %127
  %129 = vrot.lane.b32.xlu0 %v112, 2
  %v130 = vpop.permute.xlu0 %129
  %vm137 = vcmask 44048
  %138 = vst.msk [vmem:[#allocation3] sm:$0xf] %vm137, %v120
  %139 = vst.msk [vmem:[#allocation3 + $0x4] sm:$0xf] %vm137, %v122
  %140 = vst.msk [vmem:[#allocation3 + $0x8] sm:$0xf] %vm137, %v124
  %141 = vst.msk [vmem:[#allocation3 + $0xc] sm:$0xf] %vm137, %v126
  %142 = vst.msk [vmem:[#allocation3 + $0x10] sm:$0xf] %vm137, %v128
  %143 = vst.msk [vmem:[#allocation3 + $0x14] sm:$0xf] %vm137, %v130
  %144 = vrot.lane.b32.xlu0 %v107, 126
  %v145 = vpop.permute.xlu0 %144
  %146 = vrot.lane.b32.xlu0 %v108, 126
  %v147 = vpop.permute.xlu0 %146
  %148 = vrot.lane.b32.xlu0 %v109, 126
  %v149 = vpop.permute.xlu0 %148
  %150 = vrot.lane.b32.xlu0 %v110, 126
  %v151 = vpop.permute.xlu0 %150
  %152 = vrot.lane.b32.xlu0 %v111, 126
  %v153 = vpop.permute.xlu0 %152
  %154 = vrot.lane.b32.xlu0 %v112, 126
  %v155 = vpop.permute.xlu0 %154
  %vm162 = vcmask 3072
  %163 = vst.msk [vmem:[#allocation3] sm:$0xf] %vm162, %v145
  %164 = vst.msk [vmem:[#allocation3 + $0x4] sm:$0xf] %vm162, %v147
  %165 = vst.msk [vmem:[#allocation3 + $0x8] sm:$0xf] %vm162, %v149
  %166 = vst.msk [vmem:[#allocation3 + $0xc] sm:$0xf] %vm162, %v151
  %167 = vst.msk [vmem:[#allocation3 + $0x10] sm:$0xf] %vm162, %v153
  %168 = vst.msk [vmem:[#allocation3 + $0x14] sm:$0xf] %vm162, %v155
  %vm169 = vcmask 11272
  %170 = vst.msk [vmem:[#allocation3] sm:$0xf] %vm169, %v107
  %171 = vst.msk [vmem:[#allocation3 + $0x4] sm:$0xf] %vm169, %v108
  %172 = vst.msk [vmem:[#allocation3 + $0x8] sm:$0xf] %vm169, %v109
  %173 = vst.msk [vmem:[#allocation3 + $0xc] sm:$0xf] %vm169, %v110
  %174 = vst.msk [vmem:[#allocation3 + $0x10] sm:$0xf] %vm169, %v111
  %175 = vst.msk [vmem:[#allocation3 + $0x14] sm:$0xf] %vm169, %v112
  %176 = vrot.lane.b32.xlu0 %v107, 4
  %v177 = vpop.permute.xlu0 %176
  %178 = vrot.lane.b32.xlu0 %v108, 4
  %v179 = vpop.permute.xlu0 %178
  %180 = vrot.lane.b32.xlu0 %v109, 4
  %v181 = vpop.permute.xlu0 %180
  %182 = vrot.lane.b32.xlu0 %v110, 4
  %v183 = vpop.permute.xlu0 %182
  %184 = vrot.lane.b32.xlu0 %v111, 4
  %v185 = vpop.permute.xlu0 %184
  %186 = vrot.lane.b32.xlu0 %v112, 4
  %v187 = vpop.permute.xlu0 %186
  %vm194 = vcmask 52272
  %195 = vst.msk [vmem:[#allocation3] sm:$0xf] %vm194, %v177
  %196 = vst.msk [vmem:[#allocation3 + $0x4] sm:$0xf] %vm194, %v179
  %197 = vst.msk [vmem:[#allocation3 + $0x8] sm:$0xf] %vm194, %v181
  %198 = vst.msk [vmem:[#allocation3 + $0xc] sm:$0xf] %vm194, %v183
  %199 = vst.msk [vmem:[#allocation3 + $0x10] sm:$0xf] %vm194, %v185
  %200 = vst.msk [vmem:[#allocation3 + $0x14] sm:$0xf] %vm194, %v187
  %201 = vrot.lane.b32.xlu0 %v107, 6
  %v202 = vpop.permute.xlu0 %201
  %203 = vrot.lane.b32.xlu0 %v108, 6
  %v204 = vpop.permute.xlu0 %203
  %205 = vrot.lane.b32.xlu0 %v109, 6
  %v206 = vpop.permute.xlu0 %205
  %207 = vrot.lane.b32.xlu0 %v110, 6
  %v208 = vpop.permute.xlu0 %207
  %209 = vrot.lane.b32.xlu0 %v111, 6
  %v210 = vpop.permute.xlu0 %209
  %211 = vrot.lane.b32.xlu0 %v112, 6
  %v212 = vpop.permute.xlu0 %211
  %vm219 = vcmask 60472
  %220 = vst.msk [vmem:[#allocation3] sm:$0xf] %vm219, %v202
  %221 = vst.msk [vmem:[#allocation3 + $0x4] sm:$0xf] %vm219, %v204
  %222 = vst.msk [vmem:[#allocation3 + $0x8] sm:$0xf] %vm219, %v206
  %223 = vst.msk [vmem:[#allocation3 + $0xc] sm:$0xf] %vm219, %v208
  %224 = vst.msk [vmem:[#allocation3 + $0x10] sm:$0xf] %vm219, %v210
  %225 = vst.msk [vmem:[#allocation3 + $0x14] sm:$0xf] %vm219, %v212
  %v226 = vld [vmem:[#allocation3] sm:$0xf]
  %v227 = vld [vmem:[#allocation3 + $0x4] sm:$0xf]
  %v228 = vld [vmem:[#allocation3 + $0x8] sm:$0xf]
  %v229 = vld [vmem:[#allocation3 + $0xc] sm:$0xf]
  %v230 = vld [vmem:[#allocation3 + $0x10] sm:$0xf]
  %v231 = vld [vmem:[#allocation3 + $0x14] sm:$0xf]
  %238 = vrot.lane.b32.xlu0 %v226, 124
  %v239 = vpop.permute.xlu0 %238
  %240 = vrot.lane.b32.xlu0 %v227, 124
  %v241 = vpop.permute.xlu0 %240
  %242 = vrot.lane.b32.xlu0 %v228, 124
  %v243 = vpop.permute.xlu0 %242
  %244 = vrot.lane.b32.xlu0 %v229, 124
  %v245 = vpop.permute.xlu0 %244
  %246 = vrot.lane.b32.xlu0 %v230, 124
  %v247 = vpop.permute.xlu0 %246
  %248 = vrot.lane.b32.xlu0 %v231, 124
  %v249 = vpop.permute.xlu0 %248
  %v256 = vadd.f32 %v226, %v239
  %v257 = vadd.f32 %v227, %v241
  %v258 = vadd.f32 %v228, %v243
  %v259 = vadd.f32 %v229, %v245
  %v260 = vadd.f32 %v230, %v247
  %v261 = vadd.f32 %v231, %v249
  %262 = vrot.lane.b32.xlu0 %v226, 126
  %v263 = vpop.permute.xlu0 %262
  %264 = vrot.lane.b32.xlu0 %v227, 126
  %v265 = vpop.permute.xlu0 %264
  %266 = vrot.lane.b32.xlu0 %v228, 126
  %v267 = vpop.permute.xlu0 %266
  %268 = vrot.lane.b32.xlu0 %v229, 126
  %v269 = vpop.permute.xlu0 %268
  %270 = vrot.lane.b32.xlu0 %v230, 126
  %v271 = vpop.permute.xlu0 %270
  %272 = vrot.lane.b32.xlu0 %v231, 126
  %v273 = vpop.permute.xlu0 %272
  %v280 = vadd.f32 %v226, %v263
  %v281 = vadd.f32 %v227, %v265
  %v282 = vadd.f32 %v228, %v267
  %v283 = vadd.f32 %v229, %v269
  %v284 = vadd.f32 %v230, %v271
  %v285 = vadd.f32 %v231, %v273
  %v286 = vmul.f32 %v280, 4.0
  %v287 = vmul.f32 %v281, 4.0
  %v288 = vmul.f32 %v282, 4.0
  %v289 = vmul.f32 %v283, 4.0
  %v290 = vmul.f32 %v284, 4.0
  %v291 = vmul.f32 %v285, 4.0
  %298 = vrot.lane.b32.xlu0 %v286, 127
  %v299 = vpop.permute.xlu0 %298
  %300 = vrot.lane.b32.xlu0 %v287, 127
  %v301 = vpop.permute.xlu0 %300
  %302 = vrot.lane.b32.xlu0 %v288, 127
  %v303 = vpop.permute.xlu0 %302
  %304 = vrot.lane.b32.xlu0 %v289, 127
  %v305 = vpop.permute.xlu0 %304
  %306 = vrot.lane.b32.xlu0 %v290, 127
  %v307 = vpop.permute.xlu0 %306
  %308 = vrot.lane.b32.xlu0 %v291, 127
  %v309 = vpop.permute.xlu0 %308
  %v316 = vadd.f32 %v256, %v299
  %v317 = vadd.f32 %v257, %v301
  %v318 = vadd.f32 %v258, %v303
  %v319 = vadd.f32 %v259, %v305
  %v320 = vadd.f32 %v260, %v307
  %v321 = vadd.f32 %v261, %v309
  %v322 = vmul.f32 %v226, 6.0
  %v323 = vmul.f32 %v227, 6.0
  %v324 = vmul.f32 %v228, 6.0
  %v325 = vmul.f32 %v229, 6.0
  %v326 = vmul.f32 %v230, 6.0
  %v327 = vmul.f32 %v231, 6.0
  %334 = vrot.lane.b32.xlu0 %v322, 126
  %v335 = vpop.permute.xlu0 %334
  %336 = vrot.lane.b32.xlu0 %v323, 126
  %v337 = vpop.permute.xlu0 %336
  %338 = vrot.lane.b32.xlu0 %v324, 126
  %v339 = vpop.permute.xlu0 %338
  %340 = vrot.lane.b32.xlu0 %v325, 126
  %v341 = vpop.permute.xlu0 %340
  %342 = vrot.lane.b32.xlu0 %v326, 126
  %v343 = vpop.permute.xlu0 %342
  %344 = vrot.lane.b32.xlu0 %v327, 126
  %v345 = vpop.permute.xlu0 %344
  %v352 = vadd.f32 %v316, %v335
  %v353 = vadd.f32 %v317, %v337
  %v354 = vadd.f32 %v318, %v339
  %v355 = vadd.f32 %v319, %v341
  %v356 = vadd.f32 %v320, %v343
  %v357 = vadd.f32 %v321, %v345
  %v358 = vmul.f32 %v352, 0.00390625
  %v359 = vmul.f32 %v353, 0.00390625
  %v360 = vmul.f32 %v354, 0.00390625
  %v361 = vmul.f32 %v355, 0.00390625
  %v362 = vmul.f32 %v356, 0.00390625
  %v363 = vmul.f32 %v357, 0.00390625
  %364 = vst.msk [vmem:[%s1] sm:$0xf] %vm14, %v358
  %365 = vst.msk [vmem:[%s1 + $0x4] sm:$0xf] %vm14, %v359
  %366 = vst.msk [vmem:[%s1 + $0x8] sm:$0xf] %vm14, %v360
  %367 = vst.msk [vmem:[%s1 + $0xc] sm:$0xf] %vm14, %v361
  %368 = vst.msk [vmem:[%s1 + $0x10] sm:$0xf] %vm14, %v362
  %369 = vst.msk [vmem:[%s1 + $0x14] sm:$0xf] %vm14, %v363
  // Predicated region
  $region6: #{gauss_pyramid_conv.5} parent=0 // pred_check
    _
  $region7: #{gauss_pyramid_conv.5} parent=0 // pred_check_branch
    %371 = sbr.rel (0) target = $region9
  $region8: #{gauss_pyramid_conv.5} parent=0 // pred_region
    _
  $region9: #{gauss_pyramid_conv.5} parent=0 // pred_fallthru
    _
  // Predicated region
  $region10: #{gauss_pyramid_conv.5} parent=0 // pred_check
    _
  $region11: #{gauss_pyramid_conv.5} parent=0 // pred_check_branch
    %373 = sbr.rel (0) target = $region13
  $region12: #{gauss_pyramid_conv.5} parent=0 // pred_region
    _
  $region13: #{gauss_pyramid_conv.5} parent=0 // pred_fallthru
    _

</llo_original>
